<compile_context>
chip_gen: v5e
topology: v5e:2x2
jax: 0.10.0
libtpu: 0.0.40
codegen_flags: <defaults>
</compile_context>

<pallas_src>
import jax
import jax.numpy as jnp
from jax.experimental import pallas as pl
from jax.experimental.pallas import tpu as pltpu


# ----------------------------------------------------------------------------
# GRU recurrence kernel (PyTorch nn.GRU gate ordering: r, z, n)
#
# gi_ref already contains  x_t @ W_ih^T + b_ih  (+ b_hh for the r,z halves,
# and for the decoders also the constant context contribution).  Only the
# hidden-state matmul and the gate nonlinearities remain in the serial loop.
# The final-state output (hN_ref, constant block index along t) doubles as the
# recurrence carry, so no extra VMEM scratch / extra store per step is needed.
# ----------------------------------------------------------------------------
def _gru_kernel(gi_ref, h0_ref, whh_ref, bhn_ref, out_ref, hN_ref):
    H = hN_ref.shape[-1]
    t = pl.program_id(1)

    @pl.when(t == 0)
    def _():
        hN_ref[...] = h0_ref[...]

    h = hN_ref[0]                                    # (B, H)  f32 carry
    gi = gi_ref[0, 0]                                # (B, 3H) f32, precomputed
    gh = jnp.dot(h.astype(jnp.bfloat16), whh_ref[0],
                 preferred_element_type=jnp.float32)  # (B, 3H)

    r = jax.nn.sigmoid(gi[:, 0:H] + gh[:, 0:H])
    z = jax.nn.sigmoid(gi[:, H:2 * H] + gh[:, H:2 * H])
    n = jnp.tanh(gi[:, 2 * H:] + r * (gh[:, 2 * H:] + bhn_ref[0]))
    h_new = (1.0 - z) * n + z * h

    hN_ref[0] = h_new
    out_ref[0, 0] = h_new


def gru_stack(gi, h0, whh_t, bhn):
    """Run S independent single-layer GRU recurrences.

    gi:    (S, L, B, 3H) f32  -- precomputed input projections (biases folded)
    h0:    (S, B, H)     f32
    whh_t: (S, H, 3H)    bf16 -- W_hh transposed
    bhn:   (S, 1, H)     f32  -- b_hh slice for the n gate
    Returns (outputs (S, L, B, H), final hidden (S, B, H)).
    """
    S, L, B, H3 = gi.shape
    H = H3 // 3
    out, h_n = pl.pallas_call(
        _gru_kernel,
        out_shape=(jax.ShapeDtypeStruct((S, L, B, H), jnp.float32),
                   jax.ShapeDtypeStruct((S, B, H), jnp.float32)),
        grid_spec=pltpu.PrefetchScalarGridSpec(
            num_scalar_prefetch=0,
            grid=(S, L),
            in_specs=[
                pl.BlockSpec((1, 1, B, H3), lambda s, t: (s, t, 0, 0)),
                pl.BlockSpec((1, B, H), lambda s, t: (s, 0, 0)),
                pl.BlockSpec((1, H, H3), lambda s, t: (s, 0, 0)),
                pl.BlockSpec((1, 1, H), lambda s, t: (s, 0, 0)),
            ],
            out_specs=[
                pl.BlockSpec((1, 1, B, H), lambda s, t: (s, t, 0, 0)),
                pl.BlockSpec((1, B, H), lambda s, t: (s, 0, 0)),
            ],
        ),
        compiler_params=pltpu.CompilerParams(
            dimension_semantics=("parallel", "arbitrary")),
    )(gi, h0, whh_t, bhn)
    return out, h_n


# ----------------------------------------------------------------------------
# Fused decoder head: per-decoder Linear(D->D) followed by the shared
# output_layer(D->vocab), vocab dimension tiled.  Output weight is loaded once
# (constant block index); the intermediate y is cached in VMEM across vocab
# tiles so the small first matmul is not recomputed.
# ----------------------------------------------------------------------------
def _head_kernel(h_ref, lw_ref, lb_ref, ow_ref, ob_ref, o_ref, y_scr):
    @pl.when(pl.program_id(1) == 0)
    def _():
        y = jnp.dot(h_ref[0], lw_ref[0],
                    preferred_element_type=jnp.float32) + lb_ref[0]
        y_scr[...] = y.astype(jnp.bfloat16)

    o_ref[0] = (jnp.dot(y_scr[...], ow_ref[...],
                        preferred_element_type=jnp.float32) + ob_ref[...])


def decoder_head(h, lin_w_t, lin_b, out_w_t, out_b):
    """h: (S, M, D) bf16; lin_w_t: (S, D, D) bf16; lin_b: (S, 1, D) f32;
    out_w_t: (D, V) bf16; out_b: (1, V) f32  ->  (S, M, V) f32."""
    S, M, D = h.shape
    V = out_w_t.shape[-1]
    tn = 512 if V % 512 == 0 else V     # vocab tile; keeps VMEM bounded if V scales
    return pl.pallas_call(
        _head_kernel,
        out_shape=jax.ShapeDtypeStruct((S, M, V), jnp.float32),
        grid_spec=pltpu.PrefetchScalarGridSpec(
            num_scalar_prefetch=0,
            grid=(S, pl.cdiv(V, tn)),
            in_specs=[
                pl.BlockSpec((1, M, D), lambda s, j: (s, 0, 0)),
                pl.BlockSpec((1, D, D), lambda s, j: (s, 0, 0)),
                pl.BlockSpec((1, 1, D), lambda s, j: (s, 0, 0)),
                pl.BlockSpec((D, tn), lambda s, j: (0, j)),
                pl.BlockSpec((1, tn), lambda s, j: (0, j)),
            ],
            out_specs=pl.BlockSpec((1, M, tn), lambda s, j: (s, 0, j)),
            scratch_shapes=[pltpu.VMEM((M, D), jnp.bfloat16)],
        ),
        compiler_params=pltpu.CompilerParams(
            dimension_semantics=("parallel", "arbitrary")),
    )(h, lin_w_t, lin_b, out_w_t, out_b)


# ----------------------------------------------------------------------------
# Parameter init (PyTorch layout) and one-time prep into kernel layout
# ----------------------------------------------------------------------------
def _xavier(key, shape):
    fan_out, fan_in = shape[0], shape[1]
    limit = (6.0 / (fan_in + fan_out)) ** 0.5
    return jax.random.uniform(key, shape, jnp.float32, -limit, limit)


def init_params(key, vocab_size, d_model, max_len=64):
    D = d_model
    ks = jax.random.split(key, 16)
    z = lambda n: jnp.zeros((n,), jnp.float32)
    return {
        'embedding':  _xavier(ks[0], (vocab_size, D)),
        'pos_weight': _xavier(ks[1], (max_len, D)),
        # encoder GRU (input D -> hidden D)
        'enc_w_ih': _xavier(ks[2], (3 * D, D)),
        'enc_w_hh': _xavier(ks[3], (3 * D, D)),
        'enc_b_ih': z(3 * D), 'enc_b_hh': z(3 * D),
        # albert pooler 768 -> 128
        'pooler_w': _xavier(ks[4], (D, 768)), 'pooler_b': z(D),
        # memory linear 2D -> D
        'mem_w': _xavier(ks[5], (D, 2 * D)), 'mem_b': z(D),
        # forward decoder GRU (input 2D -> hidden D) + linear D -> D
        'for_w_ih': _xavier(ks[6], (3 * D, 2 * D)),
        'for_w_hh': _xavier(ks[7], (3 * D, D)),
        'for_b_ih': z(3 * D), 'for_b_hh': z(3 * D),
        'for_lin_w': _xavier(ks[8], (D, D)), 'for_lin_b': z(D),
        # backward decoder
        'back_w_ih': _xavier(ks[9], (3 * D, 2 * D)),
        'back_w_hh': _xavier(ks[10], (3 * D, D)),
        'back_b_ih': z(3 * D), 'back_b_hh': z(3 * D),
        'back_lin_w': _xavier(ks[11], (D, D)), 'back_lin_b': z(D),
        # output layer D -> vocab
        'out_w': _xavier(ks[12], (vocab_size, D)), 'out_b': z(vocab_size),
    }


def _merge_gru_bias(b_ih, b_hh, H):
    # r and z halves of b_hh can be folded into the precomputed input
    # projection; the n half must stay inside r * (W_hn h + b_hn).
    bias_rzn = jnp.concatenate([b_ih[:2 * H] + b_hh[:2 * H], b_ih[2 * H:]])
    return bias_rzn, b_hh[2 * H:]


def prepare_params(raw, d_model):
    """One-time transpose / bf16-cast / bias-merge into kernel layout."""
    D = H = d_model
    bf = jnp.bfloat16
    enc_bias, enc_bhn = _merge_gru_bias(raw['enc_b_ih'], raw['enc_b_hh'], H)

    dec_wih = jnp.stack([raw['for_w_ih'], raw['back_w_ih']])        # (2, 3H, 2D)
    dec_whh = jnp.stack([raw['for_w_hh'], raw['back_w_hh']])        # (2, 3H, H)
    dec_bias, dec_bhn = [], []
    for pref in ('for', 'back'):
        b, bn = _merge_gru_bias(raw[f'{pref}_b_ih'], raw[f'{pref}_b_hh'], H)
        dec_bias.append(b)
        dec_bhn.append(bn)
    dec_wih_t = jnp.transpose(dec_wih, (0, 2, 1))                   # (2, 2D, 3H)

    return {
        'embedding': raw['embedding'],
        'pos_weight': raw['pos_weight'],
        # encoder
        'enc_wih_t': jnp.transpose(raw['enc_w_ih']).astype(bf),         # (D, 3H)
        'enc_whh_t': jnp.transpose(raw['enc_w_hh'])[None].astype(bf),   # (1, H, 3H)
        'enc_bias': enc_bias,                                           # (3H,)
        'enc_bhn': enc_bhn.reshape(1, 1, H),                            # (1, 1, H)
        # tiny linears (plain XLA)
        'pooler_w_t': jnp.transpose(raw['pooler_w']), 'pooler_b': raw['pooler_b'],
        'mem_w_t': jnp.transpose(raw['mem_w']), 'mem_b': raw['mem_b'],
        # stacked decoders: index 0 = forward decoder, 1 = backward decoder
        'dec_wih_x_t': dec_wih_t[:, :D, :].astype(bf),                  # (2, D, 3H) tgt part
        'dec_wih_c_t': dec_wih_t[:, D:, :].astype(bf),                  # (2, D, 3H) context part
        'dec_whh_t': jnp.transpose(dec_whh, (0, 2, 1)).astype(bf),      # (2, H, 3H)
        'dec_bias': jnp.stack(dec_bias),                                # (2, 3H)
        'dec_bhn': jnp.stack(dec_bhn)[:, None, :],                      # (2, 1, H)
        'dec_lin_w_t': jnp.stack([jnp.transpose(raw['for_lin_w']),
                                  jnp.transpose(raw['back_lin_w'])]).astype(bf),  # (2, D, D)
        'dec_lin_b': jnp.stack([raw['for_lin_b'], raw['back_lin_b']])[:, None, :],  # (2, 1, D)
        # shared output layer
        'out_w_t': jnp.transpose(raw['out_w']).astype(bf),              # (D, V)
        'out_b': raw['out_b'][None, :],                                 # (1, V)
    }


# ----------------------------------------------------------------------------
# S2sGRU forward (inference mode: dropout layers are identity)
# ----------------------------------------------------------------------------
def s2s_gru_forward(params, src_ids, back_tgt_ids, for_tgt_ids, senti_hidden):
    emb = params['embedding']
    D = emb.shape[1]
    bf = jnp.bfloat16

    # embedding + transpose(0,1) -> (L, B, D), then LearnedPositionEncoding
    src = jnp.transpose(emb[src_ids], (1, 0, 2))
    back_tgt = jnp.transpose(emb[back_tgt_ids], (1, 0, 2))
    for_tgt = jnp.transpose(emb[for_tgt_ids], (1, 0, 2))
    pos = params['pos_weight']
    src = src + pos[:src.shape[0], None, :]
    back_tgt = back_tgt + pos[:back_tgt.shape[0], None, :]
    for_tgt = for_tgt + pos[:for_tgt.shape[0], None, :]

    Ls, B, _ = src.shape
    Lt = for_tgt.shape[0]

    # ---- encoder: input projection hoisted out of the recurrence ----------
    gi_enc = (jnp.dot(src.reshape(Ls * B, D).astype(bf), params['enc_wih_t'],
                      preferred_element_type=jnp.float32)
              .reshape(1, Ls, B, 3 * D) + params['enc_bias'])
    h0_enc = jnp.zeros((1, B, D), jnp.float32)
    _, enc_state = gru_stack(gi_enc, h0_enc,
                             params['enc_whh_t'], params['enc_bhn'])
    enc_state = enc_state[0]                                        # (B, D)

    # ---- Albert pooler + memory_linear (tiny: plain XLA) -------------------
    senti = jnp.mean(senti_hidden, axis=1)                          # (B, 768)
    senti = jnp.dot(senti, params['pooler_w_t']) + params['pooler_b']
    memory = (jnp.dot(jnp.concatenate([enc_state, senti], axis=-1),
                      params['mem_w_t']) + params['mem_b'])         # (B, D)

    # TODO(synk): the original passes a tuple (state[0], memory) as nn.GRU
    # hidden, which nn.GRU does not accept; we use `memory` as decoder context
    # AND h0 (same choice as the previous, documented version).

    # ---- both decoders stacked: fold constant context into gi --------------
    tgt = jnp.stack([for_tgt, back_tgt])                            # (2, Lt, B, D)
    gi_x = jnp.einsum('slbd,sdh->slbh', tgt.astype(bf), params['dec_wih_x_t'],
                      preferred_element_type=jnp.float32)
    gi_c = jnp.einsum('bd,sdh->sbh', memory.astype(bf), params['dec_wih_c_t'],
                      preferred_element_type=jnp.float32)
    gi_dec = gi_x + gi_c[:, None] + params['dec_bias'][:, None, None, :]
    h0_dec = jnp.broadcast_to(memory[None], (2, B, D))

    dec_out, _ = gru_stack(gi_dec, h0_dec,
                           params['dec_whh_t'], params['dec_bhn'])  # (2, Lt, B, D)

    # ---- fused per-decoder linear + shared output layer ---------------------
    logits = decoder_head(dec_out.reshape(2, Lt * B, D).astype(bf),
                          params['dec_lin_w_t'], params['dec_lin_b'],
                          params['out_w_t'], params['out_b'])       # (2, Lt*B, V)
    V = logits.shape[-1]
    logits = logits.reshape(2, Lt, B, V)
    return logits[0], logits[1]


if __name__ == "__main__":
    vocab_size = 512
    d_model = 128
    B = 2
    L_src = 8
    L_tgt = 8
    T_albert = 6

    root = jax.random.PRNGKey(0)
    k_params, k_src, k_back, k_for, k_senti = jax.random.split(root, 5)

    raw_params = init_params(k_params, vocab_size, d_model)
    params = prepare_params(raw_params, d_model)

    src_ids = jax.random.randint(k_src, (B, L_src), 0, vocab_size)
    back_tgt_ids = jax.random.randint(k_back, (B, L_tgt), 0, vocab_size)
    for_tgt_ids = jax.random.randint(k_for, (B, L_tgt), 0, vocab_size)
    # TODO(synk): stand-in for albert(...)['hidden_states'][-1]  (B, T, 768)
    senti_hidden = jax.random.normal(k_senti, (B, T_albert, 768), jnp.float32)

    fwd = jax.jit(s2s_gru_forward)
    for_out, back_out = fwd(params, src_ids, back_tgt_ids, for_tgt_ids, senti_hidden)
    jax.block_until_ready((for_out, back_out))

    assert for_out.shape == (L_tgt, B, vocab_size), for_out.shape
    assert back_out.shape == (L_tgt, B, vocab_size), back_out.shape
    assert jnp.all(jnp.isfinite(for_out)) and jnp.all(jnp.isfinite(back_out))
    print("KERNEL_OK")
</pallas_src>

<mosaic_0001>
module attributes {stable_mosaic.version = 11 : i64} {
  func.func @_gru_kernel(%arg0: i32, %arg1: i32, %arg2: memref<1x1x2x384xf32, #tpu.memory_space<vmem>>, %arg3: memref<1x2x128xf32, #tpu.memory_space<vmem>>, %arg4: memref<1x128x384xbf16, #tpu.memory_space<vmem>>, %arg5: memref<1x1x128xf32, #tpu.memory_space<vmem>>, %arg6: memref<1x1x2x128xf32, #tpu.memory_space<vmem>>, %arg7: memref<1x2x128xf32, #tpu.memory_space<vmem>>) attributes {dimension_semantics = [#tpu.dimension_semantics<parallel>, #tpu.dimension_semantics<arbitrary>], iteration_bounds = array<i64: 1, 8>, scalar_prefetch = 0 : i64, scratch_operands = 0 : i64, tpu.core_type = #tpu.core_type<tc>, window_params = [{transform_indices = @transform_0, window_bounds = array<i64: 1, 1, 2, 384>}, {transform_indices = @transform_1, window_bounds = array<i64: 1, 2, 128>}, {transform_indices = @transform_2, window_bounds = array<i64: 1, 128, 384>}, {transform_indices = @transform_3, window_bounds = array<i64: 1, 1, 128>}, {transform_indices = @transform_4, window_bounds = array<i64: 1, 1, 2, 128>}, {transform_indices = @transform_5, window_bounds = array<i64: 1, 2, 128>}]} {
    %c0_i32 = arith.constant 0 : i32
    %0 = arith.cmpi eq, %arg1, %c0_i32 : i32
    %1 = arith.extui %0 : i1 to i32
    %c0_i32_0 = arith.constant 0 : i32
    %2 = arith.cmpi ne, %1, %c0_i32_0 : i32
    scf.if %2 {
      %c0_23 = arith.constant 0 : index
      %c0_24 = arith.constant 0 : index
      %c0_25 = arith.constant 0 : index
      %47 = vector.load %arg3[%c0_23, %c0_24, %c0_25] : memref<1x2x128xf32, #tpu.memory_space<vmem>>, vector<1x2x128xf32>
      %c0_26 = arith.constant 0 : index
      %c0_27 = arith.constant 0 : index
      %c0_28 = arith.constant 0 : index
      %48 = vector.load %arg7[%c0_26, %c0_27, %c0_28] : memref<1x2x128xf32, #tpu.memory_space<vmem>>, vector<1x2x128xf32>
      tpu.vector_store %arg7[%c0_26, %c0_27, %c0_28], %47 {strides = array<i32>} : memref<1x2x128xf32, #tpu.memory_space<vmem>>, vector<1x2x128xf32>,
    } else {
    }
    %c0 = arith.constant 0 : index
    %c0_1 = arith.constant 0 : index
    %c0_2 = arith.constant 0 : index
    %3 = vector.load %arg7[%c0, %c0_1, %c0_2] : memref<1x2x128xf32, #tpu.memory_space<vmem>>, vector<1x2x128xf32>
    %4 = vector.shape_cast %3 : vector<1x2x128xf32> to vector<2x128xf32>
    %c0_3 = arith.constant 0 : index
    %c0_4 = arith.constant 0 : index
    %c0_5 = arith.constant 0 : index
    %c0_6 = arith.constant 0 : index
    %5 = vector.load %arg2[%c0_3, %c0_4, %c0_5, %c0_6] : memref<1x1x2x384xf32, #tpu.memory_space<vmem>>, vector<1x1x2x384xf32>
    %6 = vector.shape_cast %5 : vector<1x1x2x384xf32> to vector<2x384xf32>
    %7 = arith.truncf %4 : vector<2x128xf32> to vector<2x128xbf16>
    %c0_7 = arith.constant 0 : index
    %c0_8 = arith.constant 0 : index
    %c0_9 = arith.constant 0 : index
    %8 = vector.load %arg4[%c0_7, %c0_8, %c0_9] : memref<1x128x384xbf16, #tpu.memory_space<vmem>>, vector<1x128x384xbf16>
    %9 = vector.shape_cast %8 : vector<1x128x384xbf16> to vector<128x384xbf16>
    %cst = arith.constant dense<0.000000e+00> : vector<2x384xf32>
    %10 = tpu.matmul %7, %9, %cst {dimension_numbers = #tpu.dot_dimension_numbers<[1], [0], [0], [1], [0, 0, 1, 1], [], []>} : vector<2x128xbf16>, vector<128x384xbf16>, vector<2x384xf32> -> vector<2x384xf32>
    %11 = vector.extract_strided_slice %6 {offsets = [0, 0], sizes = [2, 128], strides = [1, 1]} : vector<2x384xf32> to vector<2x128xf32>
    %12 = vector.extract_strided_slice %10 {offsets = [0, 0], sizes = [2, 128], strides = [1, 1]} : vector<2x384xf32> to vector<2x128xf32>
    %13 = arith.addf %11, %12 : vector<2x128xf32>
    %14 = arith.negf %13 : vector<2x128xf32>
    %15 = math.exp %14 : vector<2x128xf32>
    %cst_10 = arith.constant 1.000000e+00 : f32
    %16 = vector.broadcast %cst_10 : f32 to vector<2x128xf32>
    %17 = arith.addf %16, %15 : vector<2x128xf32>
    %18 = arith.divf %16, %17 : vector<2x128xf32>
    %19 = vector.extract_strided_slice %6 {offsets = [0, 128], sizes = [2, 128], strides = [1, 1]} : vector<2x384xf32> to vector<2x128xf32>
    %20 = vector.extract_strided_slice %10 {offsets = [0, 128], sizes = [2, 128], strides = [1, 1]} : vector<2x384xf32> to vector<2x128xf32>
    %21 = arith.addf %19, %20 : vector<2x128xf32>
    %22 = arith.negf %21 : vector<2x128xf32>
    %23 = math.exp %22 : vector<2x128xf32>
    %cst_11 = arith.constant 1.000000e+00 : f32
    %24 = vector.broadcast %cst_11 : f32 to vector<2x128xf32>
    %25 = arith.addf %24, %23 : vector<2x128xf32>
    %26 = arith.divf %24, %25 : vector<2x128xf32>
    %27 = vector.extract_strided_slice %6 {offsets = [0, 256], sizes = [2, 128], strides = [1, 1]} : vector<2x384xf32> to vector<2x128xf32>
    %28 = vector.extract_strided_slice %10 {offsets = [0, 256], sizes = [2, 128], strides = [1, 1]} : vector<2x384xf32> to vector<2x128xf32>
    %c0_12 = arith.constant 0 : index
    %c0_13 = arith.constant 0 : index
    %c0_14 = arith.constant 0 : index
    %29 = vector.load %arg5[%c0_12, %c0_13, %c0_14] : memref<1x1x128xf32, #tpu.memory_space<vmem>>, vector<1x1x128xf32>
    %30 = vector.shape_cast %29 : vector<1x1x128xf32> to vector<1x128xf32>
    %31 = vector.broadcast %30 : vector<1x128xf32> to vector<2x128xf32>
    %32 = arith.addf %28, %31 : vector<2x128xf32>
    %33 = arith.mulf %18, %32 : vector<2x128xf32>
    %34 = arith.addf %27, %33 : vector<2x128xf32>
    %35 = math.tanh %34 : vector<2x128xf32>
    %cst_15 = arith.constant 1.000000e+00 : f32
    %36 = vector.broadcast %cst_15 : f32 to vector<2x128xf32>
    %37 = arith.subf %36, %26 : vector<2x128xf32>
    %38 = arith.mulf %37, %35 : vector<2x128xf32>
    %39 = arith.mulf %26, %4 : vector<2x128xf32>
    %40 = arith.addf %38, %39 : vector<2x128xf32>
    %c0_16 = arith.constant 0 : index
    %c0_17 = arith.constant 0 : index
    %c0_18 = arith.constant 0 : index
    %41 = vector.load %arg7[%c0_16, %c0_17, %c0_18] : memref<1x2x128xf32, #tpu.memory_space<vmem>>, vector<1x2x128xf32>
    %42 = vector.shape_cast %41 : vector<1x2x128xf32> to vector<2x128xf32>
    %43 = vector.shape_cast %40 : vector<2x128xf32> to vector<1x2x128xf32>
    tpu.vector_store %arg7[%c0_16, %c0_17, %c0_18], %43 {strides = array<i32>} : memref<1x2x128xf32, #tpu.memory_space<vmem>>, vector<1x2x128xf32>,
    %c0_19 = arith.constant 0 : index
    %c0_20 = arith.constant 0 : index
    %c0_21 = arith.constant 0 : index
    %c0_22 = arith.constant 0 : index
    %44 = vector.load %arg6[%c0_19, %c0_20, %c0_21, %c0_22] : memref<1x1x2x128xf32, #tpu.memory_space<vmem>>, vector<1x1x2x128xf32>
    %45 = vector.shape_cast %44 : vector<1x1x2x128xf32> to vector<2x128xf32>
    %46 = vector.shape_cast %40 : vector<2x128xf32> to vector<1x1x2x128xf32>
    tpu.vector_store %arg6[%c0_19, %c0_20, %c0_21, %c0_22], %46 {strides = array<i32>} : memref<1x1x2x128xf32, #tpu.memory_space<vmem>>, vector<1x1x2x128xf32>,
    return
  }
  func.func @transform_0(%arg0: i32, %arg1: i32) -> (i32, i32, i32, i32) {
    %c0_i32 = arith.constant 0 : i32
    %c0_i32_0 = arith.constant 0 : i32
    %c0_i32_1 = arith.constant 0 : i32
    return %arg0, %arg1, %c0_i32, %c0_i32_0 : i32, i32, i32, i32
  }
  func.func @transform_1(%arg0: i32, %arg1: i32) -> (i32, i32, i32) {
    %c0_i32 = arith.constant 0 : i32
    %c0_i32_0 = arith.constant 0 : i32
    %c0_i32_1 = arith.constant 0 : i32
    return %arg0, %c0_i32, %c0_i32_0 : i32, i32, i32
  }
  func.func @transform_2(%arg0: i32, %arg1: i32) -> (i32, i32, i32) {
    %c0_i32 = arith.constant 0 : i32
    %c0_i32_0 = arith.constant 0 : i32
    %c0_i32_1 = arith.constant 0 : i32
    return %arg0, %c0_i32, %c0_i32_0 : i32, i32, i32
  }
  func.func @transform_3(%arg0: i32, %arg1: i32) -> (i32, i32, i32) {
    %c0_i32 = arith.constant 0 : i32
    %c0_i32_0 = arith.constant 0 : i32
    %c0_i32_1 = arith.constant 0 : i32
    return %arg0, %c0_i32, %c0_i32_0 : i32, i32, i32
  }
  func.func @transform_4(%arg0: i32, %arg1: i32) -> (i32, i32, i32, i32) {
    %c0_i32 = arith.constant 0 : i32
    %c0_i32_0 = arith.constant 0 : i32
    %c0_i32_1 = arith.constant 0 : i32
    return %arg0, %arg1, %c0_i32, %c0_i32_0 : i32, i32, i32, i32
  }
  func.func @transform_5(%arg0: i32, %arg1: i32) -> (i32, i32, i32) {
    %c0_i32 = arith.constant 0 : i32
    %c0_i32_0 = arith.constant 0 : i32
    %c0_i32_1 = arith.constant 0 : i32
    return %arg0, %c0_i32, %c0_i32_0 : i32, i32, i32
  }
}

module attributes {stable_mosaic.version = 11 : i64} {
  func.func @_gru_kernel(%arg0: i32, %arg1: i32, %arg2: memref<1x1x2x384xf32, #tpu.memory_space<vmem>>, %arg3: memref<1x2x128xf32, #tpu.memory_space<vmem>>, %arg4: memref<1x128x384xbf16, #tpu.memory_space<vmem>>, %arg5: memref<1x1x128xf32, #tpu.memory_space<vmem>>, %arg6: memref<1x1x2x128xf32, #tpu.memory_space<vmem>>, %arg7: memref<1x2x128xf32, #tpu.memory_space<vmem>>) attributes {dimension_semantics = [#tpu.dimension_semantics<parallel>, #tpu.dimension_semantics<arbitrary>], iteration_bounds = array<i64: 2, 8>, scalar_prefetch = 0 : i64, scratch_operands = 0 : i64, tpu.core_type = #tpu.core_type<tc>, window_params = [{transform_indices = @transform_0, window_bounds = array<i64: 1, 1, 2, 384>}, {transform_indices = @transform_1, window_bounds = array<i64: 1, 2, 128>}, {transform_indices = @transform_2, window_bounds = array<i64: 1, 128, 384>}, {transform_indices = @transform_3, window_bounds = array<i64: 1, 1, 128>}, {transform_indices = @transform_4, window_bounds = array<i64: 1, 1, 2, 128>}, {transform_indices = @transform_5, window_bounds = array<i64: 1, 2, 128>}]} {
    %c0_i32 = arith.constant 0 : i32
    %0 = arith.cmpi eq, %arg1, %c0_i32 : i32
    %1 = arith.extui %0 : i1 to i32
    %c0_i32_0 = arith.constant 0 : i32
    %2 = arith.cmpi ne, %1, %c0_i32_0 : i32
    scf.if %2 {
      %c0_23 = arith.constant 0 : index
      %c0_24 = arith.constant 0 : index
      %c0_25 = arith.constant 0 : index
      %47 = vector.load %arg3[%c0_23, %c0_24, %c0_25] : memref<1x2x128xf32, #tpu.memory_space<vmem>>, vector<1x2x128xf32>
      %c0_26 = arith.constant 0 : index
      %c0_27 = arith.constant 0 : index
      %c0_28 = arith.constant 0 : index
      %48 = vector.load %arg7[%c0_26, %c0_27, %c0_28] : memref<1x2x128xf32, #tpu.memory_space<vmem>>, vector<1x2x128xf32>
      tpu.vector_store %arg7[%c0_26, %c0_27, %c0_28], %47 {strides = array<i32>} : memref<1x2x128xf32, #tpu.memory_space<vmem>>, vector<1x2x128xf32>,
    } else {
    }
    %c0 = arith.constant 0 : index
    %c0_1 = arith.constant 0 : index
    %c0_2 = arith.constant 0 : index
    %3 = vector.load %arg7[%c0, %c0_1, %c0_2] : memref<1x2x128xf32, #tpu.memory_space<vmem>>, vector<1x2x128xf32>
    %4 = vector.shape_cast %3 : vector<1x2x128xf32> to vector<2x128xf32>
    %c0_3 = arith.constant 0 : index
    %c0_4 = arith.constant 0 : index
    %c0_5 = arith.constant 0 : index
    %c0_6 = arith.constant 0 : index
    %5 = vector.load %arg2[%c0_3, %c0_4, %c0_5, %c0_6] : memref<1x1x2x384xf32, #tpu.memory_space<vmem>>, vector<1x1x2x384xf32>
    %6 = vector.shape_cast %5 : vector<1x1x2x384xf32> to vector<2x384xf32>
    %7 = arith.truncf %4 : vector<2x128xf32> to vector<2x128xbf16>
    %c0_7 = arith.constant 0 : index
    %c0_8 = arith.constant 0 : index
    %c0_9 = arith.constant 0 : index
    %8 = vector.load %arg4[%c0_7, %c0_8, %c0_9] : memref<1x128x384xbf16, #tpu.memory_space<vmem>>, vector<1x128x384xbf16>
    %9 = vector.shape_cast %8 : vector<1x128x384xbf16> to vector<128x384xbf16>
    %cst = arith.constant dense<0.000000e+00> : vector<2x384xf32>
    %10 = tpu.matmul %7, %9, %cst {dimension_numbers = #tpu.dot_dimension_numbers<[1], [0], [0], [1], [0, 0, 1, 1], [], []>} : vector<2x128xbf16>, vector<128x384xbf16>, vector<2x384xf32> -> vector<2x384xf32>
    %11 = vector.extract_strided_slice %6 {offsets = [0, 0], sizes = [2, 128], strides = [1, 1]} : vector<2x384xf32> to vector<2x128xf32>
    %12 = vector.extract_strided_slice %10 {offsets = [0, 0], sizes = [2, 128], strides = [1, 1]} : vector<2x384xf32> to vector<2x128xf32>
    %13 = arith.addf %11, %12 : vector<2x128xf32>
    %14 = arith.negf %13 : vector<2x128xf32>
    %15 = math.exp %14 : vector<2x128xf32>
    %cst_10 = arith.constant 1.000000e+00 : f32
    %16 = vector.broadcast %cst_10 : f32 to vector<2x128xf32>
    %17 = arith.addf %16, %15 : vector<2x128xf32>
    %18 = arith.divf %16, %17 : vector<2x128xf32>
    %19 = vector.extract_strided_slice %6 {offsets = [0, 128], sizes = [2, 128], strides = [1, 1]} : vector<2x384xf32> to vector<2x128xf32>
    %20 = vector.extract_strided_slice %10 {offsets = [0, 128], sizes = [2, 128], strides = [1, 1]} : vector<2x384xf32> to vector<2x128xf32>
    %21 = arith.addf %19, %20 : vector<2x128xf32>
    %22 = arith.negf %21 : vector<2x128xf32>
    %23 = math.exp %22 : vector<2x128xf32>
    %cst_11 = arith.constant 1.000000e+00 : f32
    %24 = vector.broadcast %cst_11 : f32 to vector<2x128xf32>
    %25 = arith.addf %24, %23 : vector<2x128xf32>
    %26 = arith.divf %24, %25 : vector<2x128xf32>
    %27 = vector.extract_strided_slice %6 {offsets = [0, 256], sizes = [2, 128], strides = [1, 1]} : vector<2x384xf32> to vector<2x128xf32>
    %28 = vector.extract_strided_slice %10 {offsets = [0, 256], sizes = [2, 128], strides = [1, 1]} : vector<2x384xf32> to vector<2x128xf32>
    %c0_12 = arith.constant 0 : index
    %c0_13 = arith.constant 0 : index
    %c0_14 = arith.constant 0 : index
    %29 = vector.load %arg5[%c0_12, %c0_13, %c0_14] : memref<1x1x128xf32, #tpu.memory_space<vmem>>, vector<1x1x128xf32>
    %30 = vector.shape_cast %29 : vector<1x1x128xf32> to vector<1x128xf32>
    %31 = vector.broadcast %30 : vector<1x128xf32> to vector<2x128xf32>
    %32 = arith.addf %28, %31 : vector<2x128xf32>
    %33 = arith.mulf %18, %32 : vector<2x128xf32>
    %34 = arith.addf %27, %33 : vector<2x128xf32>
    %35 = math.tanh %34 : vector<2x128xf32>
    %cst_15 = arith.constant 1.000000e+00 : f32
    %36 = vector.broadcast %cst_15 : f32 to vector<2x128xf32>
    %37 = arith.subf %36, %26 : vector<2x128xf32>
    %38 = arith.mulf %37, %35 : vector<2x128xf32>
    %39 = arith.mulf %26, %4 : vector<2x128xf32>
    %40 = arith.addf %38, %39 : vector<2x128xf32>
    %c0_16 = arith.constant 0 : index
    %c0_17 = arith.constant 0 : index
    %c0_18 = arith.constant 0 : index
    %41 = vector.load %arg7[%c0_16, %c0_17, %c0_18] : memref<1x2x128xf32, #tpu.memory_space<vmem>>, vector<1x2x128xf32>
    %42 = vector.shape_cast %41 : vector<1x2x128xf32> to vector<2x128xf32>
    %43 = vector.shape_cast %40 : vector<2x128xf32> to vector<1x2x128xf32>
    tpu.vector_store %arg7[%c0_16, %c0_17, %c0_18], %43 {strides = array<i32>} : memref<1x2x128xf32, #tpu.memory_space<vmem>>, vector<1x2x128xf32>,
    %c0_19 = arith.constant 0 : index
    %c0_20 = arith.constant 0 : index
    %c0_21 = arith.constant 0 : index
    %c0_22 = arith.constant 0 : index
    %44 = vector.load %arg6[%c0_19, %c0_20, %c0_21, %c0_22] : memref<1x1x2x128xf32, #tpu.memory_space<vmem>>, vector<1x1x2x128xf32>
    %45 = vector.shape_cast %44 : vector<1x1x2x128xf32> to vector<2x128xf32>
    %46 = vector.shape_cast %40 : vector<2x128xf32> to vector<1x1x2x128xf32>
    tpu.vector_store %arg6[%c0_19, %c0_20, %c0_21, %c0_22], %46 {strides = array<i32>} : memref<1x1x2x128xf32, #tpu.memory_space<vmem>>, vector<1x1x2x128xf32>,
    return
  }
  func.func @transform_0(%arg0: i32, %arg1: i32) -> (i32, i32, i32, i32) {
    %c0_i32 = arith.constant 0 : i32
    %c0_i32_0 = arith.constant 0 : i32
    %c0_i32_1 = arith.constant 0 : i32
    return %arg0, %arg1, %c0_i32, %c0_i32_0 : i32, i32, i32, i32
  }
  func.func @transform_1(%arg0: i32, %arg1: i32) -> (i32, i32, i32) {
    %c0_i32 = arith.constant 0 : i32
    %c0_i32_0 = arith.constant 0 : i32
    %c0_i32_1 = arith.constant 0 : i32
    return %arg0, %c0_i32, %c0_i32_0 : i32, i32, i32
  }
  func.func @transform_2(%arg0: i32, %arg1: i32) -> (i32, i32, i32) {
    %c0_i32 = arith.constant 0 : i32
    %c0_i32_0 = arith.constant 0 : i32
    %c0_i32_1 = arith.constant 0 : i32
    return %arg0, %c0_i32, %c0_i32_0 : i32, i32, i32
  }
  func.func @transform_3(%arg0: i32, %arg1: i32) -> (i32, i32, i32) {
    %c0_i32 = arith.constant 0 : i32
    %c0_i32_0 = arith.constant 0 : i32
    %c0_i32_1 = arith.constant 0 : i32
    return %arg0, %c0_i32, %c0_i32_0 : i32, i32, i32
  }
  func.func @transform_4(%arg0: i32, %arg1: i32) -> (i32, i32, i32, i32) {
    %c0_i32 = arith.constant 0 : i32
    %c0_i32_0 = arith.constant 0 : i32
    %c0_i32_1 = arith.constant 0 : i32
    return %arg0, %arg1, %c0_i32, %c0_i32_0 : i32, i32, i32, i32
  }
  func.func @transform_5(%arg0: i32, %arg1: i32) -> (i32, i32, i32) {
    %c0_i32 = arith.constant 0 : i32
    %c0_i32_0 = arith.constant 0 : i32
    %c0_i32_1 = arith.constant 0 : i32
    return %arg0, %c0_i32, %c0_i32_0 : i32, i32, i32
  }
}

module attributes {stable_mosaic.version = 11 : i64} {
  func.func @_head_kernel(%arg0: i32, %arg1: i32, %arg2: memref<1x16x128xbf16, #tpu.memory_space<vmem>>, %arg3: memref<1x128x128xbf16, #tpu.memory_space<vmem>>, %arg4: memref<1x1x128xf32, #tpu.memory_space<vmem>>, %arg5: memref<128x512xbf16, #tpu.memory_space<vmem>>, %arg6: memref<1x512xf32, #tpu.memory_space<vmem>>, %arg7: memref<1x16x512xf32, #tpu.memory_space<vmem>>, %arg8: memref<16x128xbf16, #tpu.memory_space<vmem>>) attributes {dimension_semantics = [#tpu.dimension_semantics<parallel>, #tpu.dimension_semantics<arbitrary>], iteration_bounds = array<i64: 2, 1>, scalar_prefetch = 0 : i64, scratch_operands = 1 : i64, tpu.core_type = #tpu.core_type<tc>, window_params = [{transform_indices = @transform_0, window_bounds = array<i64: 1, 16, 128>}, {transform_indices = @transform_1, window_bounds = array<i64: 1, 128, 128>}, {transform_indices = @transform_2, window_bounds = array<i64: 1, 1, 128>}, {transform_indices = @transform_3, window_bounds = array<i64: 128, 512>}, {transform_indices = @transform_4, window_bounds = array<i64: 1, 512>}, {transform_indices = @transform_5, window_bounds = array<i64: 1, 16, 512>}]} {
    %c0_i32 = arith.constant 0 : i32
    %0 = arith.cmpi eq, %arg1, %c0_i32 : i32
    %1 = arith.extui %0 : i1 to i32
    %c0_i32_0 = arith.constant 0 : i32
    %2 = arith.cmpi ne, %1, %c0_i32_0 : i32
    scf.if %2 {
      %c0_9 = arith.constant 0 : index
      %c0_10 = arith.constant 0 : index
      %c0_11 = arith.constant 0 : index
      %12 = vector.load %arg2[%c0_9, %c0_10, %c0_11] : memref<1x16x128xbf16, #tpu.memory_space<vmem>>, vector<1x16x128xbf16>
      %13 = vector.shape_cast %12 : vector<1x16x128xbf16> to vector<16x128xbf16>
      %c0_12 = arith.constant 0 : index
      %c0_13 = arith.constant 0 : index
      %c0_14 = arith.constant 0 : index
      %14 = vector.load %arg3[%c0_12, %c0_13, %c0_14] : memref<1x128x128xbf16, #tpu.memory_space<vmem>>, vector<1x128x128xbf16>
      %15 = vector.shape_cast %14 : vector<1x128x128xbf16> to vector<128x128xbf16>
      %cst_15 = arith.constant dense<0.000000e+00> : vector<16x128xf32>
      %16 = tpu.matmul %13, %15, %cst_15 {dimension_numbers = #tpu.dot_dimension_numbers<[1], [0], [0], [1], [0, 0, 1, 1], [], []>} : vector<16x128xbf16>, vector<128x128xbf16>, vector<16x128xf32> -> vector<16x128xf32>
      %c0_16 = arith.constant 0 : index
      %c0_17 = arith.constant 0 : index
      %c0_18 = arith.constant 0 : index
      %17 = vector.load %arg4[%c0_16, %c0_17, %c0_18] : memref<1x1x128xf32, #tpu.memory_space<vmem>>, vector<1x1x128xf32>
      %18 = vector.shape_cast %17 : vector<1x1x128xf32> to vector<1x128xf32>
      %19 = vector.broadcast %18 : vector<1x128xf32> to vector<16x128xf32>
      %20 = arith.addf %16, %19 : vector<16x128xf32>
      %21 = arith.truncf %20 : vector<16x128xf32> to vector<16x128xbf16>
      %c0_19 = arith.constant 0 : index
      %c0_20 = arith.constant 0 : index
      %22 = vector.load %arg8[%c0_19, %c0_20] : memref<16x128xbf16, #tpu.memory_space<vmem>>, vector<16x128xbf16>
      tpu.vector_store %arg8[%c0_19, %c0_20], %21 {strides = array<i32>} : memref<16x128xbf16, #tpu.memory_space<vmem>>, vector<16x128xbf16>,
    } else {
    }
    %c0 = arith.constant 0 : index
    %c0_1 = arith.constant 0 : index
    %3 = vector.load %arg8[%c0, %c0_1] : memref<16x128xbf16, #tpu.memory_space<vmem>>, vector<16x128xbf16>
    %c0_2 = arith.constant 0 : index
    %c0_3 = arith.constant 0 : index
    %4 = vector.load %arg5[%c0_2, %c0_3] : memref<128x512xbf16, #tpu.memory_space<vmem>>, vector<128x512xbf16>
    %cst = arith.constant dense<0.000000e+00> : vector<16x512xf32>
    %5 = tpu.matmul %3, %4, %cst {dimension_numbers = #tpu.dot_dimension_numbers<[1], [0], [0], [1], [0, 0, 1, 1], [], []>} : vector<16x128xbf16>, vector<128x512xbf16>, vector<16x512xf32> -> vector<16x512xf32>
    %c0_4 = arith.constant 0 : index
    %c0_5 = arith.constant 0 : index
    %6 = vector.load %arg6[%c0_4, %c0_5] : memref<1x512xf32, #tpu.memory_space<vmem>>, vector<1x512xf32>
    %7 = vector.broadcast %6 : vector<1x512xf32> to vector<16x512xf32>
    %8 = arith.addf %5, %7 : vector<16x512xf32>
    %c0_6 = arith.constant 0 : index
    %c0_7 = arith.constant 0 : index
    %c0_8 = arith.constant 0 : index
    %9 = vector.load %arg7[%c0_6, %c0_7, %c0_8] : memref<1x16x512xf32, #tpu.memory_space<vmem>>, vector<1x16x512xf32>
    %10 = vector.shape_cast %9 : vector<1x16x512xf32> to vector<16x512xf32>
    %11 = vector.shape_cast %8 : vector<16x512xf32> to vector<1x16x512xf32>
    tpu.vector_store %arg7[%c0_6, %c0_7, %c0_8], %11 {strides = array<i32>} : memref<1x16x512xf32, #tpu.memory_space<vmem>>, vector<1x16x512xf32>,
    return
  }
  func.func @transform_0(%arg0: i32, %arg1: i32) -> (i32, i32, i32) {
    %c0_i32 = arith.constant 0 : i32
    %c0_i32_0 = arith.constant 0 : i32
    %c0_i32_1 = arith.constant 0 : i32
    return %arg0, %c0_i32, %c0_i32_0 : i32, i32, i32
  }
  func.func @transform_1(%arg0: i32, %arg1: i32) -> (i32, i32, i32) {
    %c0_i32 = arith.constant 0 : i32
    %c0_i32_0 = arith.constant 0 : i32
    %c0_i32_1 = arith.constant 0 : i32
    return %arg0, %c0_i32, %c0_i32_0 : i32, i32, i32
  }
  func.func @transform_2(%arg0: i32, %arg1: i32) -> (i32, i32, i32) {
    %c0_i32 = arith.constant 0 : i32
    %c0_i32_0 = arith.constant 0 : i32
    %c0_i32_1 = arith.constant 0 : i32
    return %arg0, %c0_i32, %c0_i32_0 : i32, i32, i32
  }
  func.func @transform_3(%arg0: i32, %arg1: i32) -> (i32, i32) {
    %c0_i32 = arith.constant 0 : i32
    %c0_i32_0 = arith.constant 0 : i32
    return %c0_i32, %arg1 : i32, i32
  }
  func.func @transform_4(%arg0: i32, %arg1: i32) -> (i32, i32) {
    %c0_i32 = arith.constant 0 : i32
    %c0_i32_0 = arith.constant 0 : i32
    return %c0_i32, %arg1 : i32, i32
  }
  func.func @transform_5(%arg0: i32, %arg1: i32) -> (i32, i32, i32) {
    %c0_i32 = arith.constant 0 : i32
    %c0_i32_0 = arith.constant 0 : i32
    return %arg0, %c0_i32, %arg1 : i32, i32, i32
  }
}

</mosaic_0001>

<llo_original>
// kernel: squeeze.4
$region0: #{squeeze.4}
  %s0 = inlined_call_operand.vmem [shape: f32[1,16,512], index: 0, kind: input, shape index: {}]
  %s1 = inlined_call_operand.hbm [shape: f32[8,2,512], index: 1, kind: output, shape index: {}]
  $region1: #{squeeze.4} parent=0
    #allocation0 [shape = 'u8[32768]{0}', space=vmem, size = 0x8000, scoped, tag = 'operand span for operand 1']
    #allocation1 [shape = 's32[1]{0}', space=sflag, size = 0x4, scoped, tag = 'scoped memory for squeeze.4']
    #allocation2 [shape = 'u8[131072]{0}', space=vmem, size = 0x20000, scoped, tag = 'scoped mem for output reshape']
    %2 = vsyncpa [#allocation1], 0
    %v3 = vld [vmem:[%s0] sm:$0xff]
    %4 = vst [vmem:[#allocation2] sm:$0x3] %v3
    %s5 = scalar_lea.vmem [#allocation2], 30
    %6 = vst [vmem:[%s5] sm:$0xc] %v3
    %s7 = scalar_lea.vmem [#allocation2], 60
    %8 = vst [vmem:[%s7] sm:$0x30] %v3
    %s9 = scalar_lea.vmem [#allocation2], 90
    %10 = vst [vmem:[%s9] sm:$0xc0] %v3
    %s11 = scalar_lea.vmem %s0, 8
    %v12 = vld [vmem:[%s11] sm:$0xff]
    %s13 = scalar_lea.vmem [#allocation2], 8
    %14 = vst [vmem:[%s13] sm:$0x3] %v12
    %s15 = scalar_lea.vmem [#allocation2], 38
    %16 = vst [vmem:[%s15] sm:$0xc] %v12
    %s17 = scalar_lea.vmem [#allocation2], 68
    %18 = vst [vmem:[%s17] sm:$0x30] %v12
    %s19 = scalar_lea.vmem [#allocation2], 98
    %20 = vst [vmem:[%s19] sm:$0xc0] %v12
    %s21 = scalar_lea.vmem %s0, 16
    %v22 = vld [vmem:[%s21] sm:$0xff]
    %s23 = scalar_lea.vmem [#allocation2], 16
    %24 = vst [vmem:[%s23] sm:$0x3] %v22
    %s25 = scalar_lea.vmem [#allocation2], 46
    %26 = vst [vmem:[%s25] sm:$0xc] %v22
    %s27 = scalar_lea.vmem [#allocation2], 76
    %28 = vst [vmem:[%s27] sm:$0x30] %v22
    %s29 = scalar_lea.vmem [#allocation2], 106
    %30 = vst [vmem:[%s29] sm:$0xc0] %v22
    %s31 = scalar_lea.vmem %s0, 24
    %v32 = vld [vmem:[%s31] sm:$0xff]
    %s33 = scalar_lea.vmem [#allocation2], 24
    %34 = vst [vmem:[%s33] sm:$0x3] %v32
    %s35 = scalar_lea.vmem [#allocation2], 54
    %36 = vst [vmem:[%s35] sm:$0xc] %v32
    %s37 = scalar_lea.vmem [#allocation2], 84
    %38 = vst [vmem:[%s37] sm:$0x30] %v32
    %s39 = scalar_lea.vmem [#allocation2], 114
    %40 = vst [vmem:[%s39] sm:$0xc0] %v32
    %s41 = scalar_lea.vmem %s0, 32
    %v42 = vld [vmem:[%s41] sm:$0xff]
    %s43 = scalar_lea.vmem [#allocation2], 128
    %44 = vst [vmem:[%s43] sm:$0x3] %v42
    %s45 = scalar_lea.vmem [#allocation2], 158
    %46 = vst [vmem:[%s45] sm:$0xc] %v42
    %s47 = scalar_lea.vmem [#allocation2], 188
    %48 = vst [vmem:[%s47] sm:$0x30] %v42
    %s49 = scalar_lea.vmem [#allocation2], 218
    %50 = vst [vmem:[%s49] sm:$0xc0] %v42
    %s51 = scalar_lea.vmem %s0, 40
    %v52 = vld [vmem:[%s51] sm:$0xff]
    %s53 = scalar_lea.vmem [#allocation2], 136
    %54 = vst [vmem:[%s53] sm:$0x3] %v52
    %s55 = scalar_lea.vmem [#allocation2], 166
    %56 = vst [vmem:[%s55] sm:$0xc] %v52
    %s57 = scalar_lea.vmem [#allocation2], 196
    %58 = vst [vmem:[%s57] sm:$0x30] %v52
    %s59 = scalar_lea.vmem [#allocation2], 226
    %60 = vst [vmem:[%s59] sm:$0xc0] %v52
    %s61 = scalar_lea.vmem %s0, 48
    %v62 = vld [vmem:[%s61] sm:$0xff]
    %s63 = scalar_lea.vmem [#allocation2], 144
    %64 = vst [vmem:[%s63] sm:$0x3] %v62
    %s65 = scalar_lea.vmem [#allocation2], 174
    %66 = vst [vmem:[%s65] sm:$0xc] %v62
    %s67 = scalar_lea.vmem [#allocation2], 204
    %68 = vst [vmem:[%s67] sm:$0x30] %v62
    %s69 = scalar_lea.vmem [#allocation2], 234
    %70 = vst [vmem:[%s69] sm:$0xc0] %v62
    %s71 = scalar_lea.vmem %s0, 56
    %v72 = vld [vmem:[%s71] sm:$0xff]
    %s73 = scalar_lea.vmem [#allocation2], 152
    %74 = vst [vmem:[%s73] sm:$0x3] %v72
    %s75 = scalar_lea.vmem [#allocation2], 182
    %76 = vst [vmem:[%s75] sm:$0xc] %v72
    %s77 = scalar_lea.vmem [#allocation2], 212
    %78 = vst [vmem:[%s77] sm:$0x30] %v72
    %s79 = scalar_lea.vmem [#allocation2], 242
    %80 = vst [vmem:[%s79] sm:$0xc0] %v72
    %s82 = ssub.s32 4, 1
    %v83 = vld [vmem:[#allocation2] sm:%s82]
    %s85 = ssub.s32 4, 1
    %86 = vst [vmem:[#allocation0] sm:%s85] %v83
    %s87 = scalar_lea.vmem [#allocation2], 8
    %v88 = vld [vmem:[%s87] sm:%s82]
    %s90 = ssub.s32 4, 1
    %s91 = scalar_lea.vmem [#allocation0], 2
    %92 = vst [vmem:[%s91] sm:%s90] %v88
    %s93 = scalar_lea.vmem [#allocation2], 16
    %v94 = vld [vmem:[%s93] sm:%s82]
    %s96 = ssub.s32 4, 1
    %s97 = scalar_lea.vmem [#allocation0], 4
    %98 = vst [vmem:[%s97] sm:%s96] %v94
    %s99 = scalar_lea.vmem [#allocation2], 24
    %v100 = vld [vmem:[%s99] sm:%s82]
    %s102 = ssub.s32 4, 1
    %s103 = scalar_lea.vmem [#allocation0], 6
    %104 = vst [vmem:[%s103] sm:%s102] %v100
    %s105 = scalar_lea.vmem [#allocation2], 32
    %v106 = vld [vmem:[%s105] sm:%s82]
    %s108 = ssub.s32 4, 1
    %s109 = scalar_lea.vmem [#allocation0], 8
    %110 = vst [vmem:[%s109] sm:%s108] %v106
    %s111 = scalar_lea.vmem [#allocation2], 40
    %v112 = vld [vmem:[%s111] sm:%s82]
    %s114 = ssub.s32 4, 1
    %s115 = scalar_lea.vmem [#allocation0], 10
    %116 = vst [vmem:[%s115] sm:%s114] %v112
    %s117 = scalar_lea.vmem [#allocation2], 48
    %v118 = vld [vmem:[%s117] sm:%s82]
    %s120 = ssub.s32 4, 1
    %s121 = scalar_lea.vmem [#allocation0], 12
    %122 = vst [vmem:[%s121] sm:%s120] %v118
    %s123 = scalar_lea.vmem [#allocation2], 56
    %v124 = vld [vmem:[%s123] sm:%s82]
    %s126 = ssub.s32 4, 1
    %s127 = scalar_lea.vmem [#allocation0], 14
    %128 = vst [vmem:[%s127] sm:%s126] %v124
    %s129 = scalar_lea.vmem [#allocation2], 64
    %v130 = vld [vmem:[%s129] sm:%s82]
    %s132 = ssub.s32 4, 1
    %s133 = scalar_lea.vmem [#allocation0], 16
    %134 = vst [vmem:[%s133] sm:%s132] %v130
    %s135 = scalar_lea.vmem [#allocation2], 72
    %v136 = vld [vmem:[%s135] sm:%s82]
    %s138 = ssub.s32 4, 1
    %s139 = scalar_lea.vmem [#allocation0], 18
    %140 = vst [vmem:[%s139] sm:%s138] %v136
    %s141 = scalar_lea.vmem [#allocation2], 80
    %v142 = vld [vmem:[%s141] sm:%s82]
    %s144 = ssub.s32 4, 1
    %s145 = scalar_lea.vmem [#allocation0], 20
    %146 = vst [vmem:[%s145] sm:%s144] %v142
    %s147 = scalar_lea.vmem [#allocation2], 88
    %v148 = vld [vmem:[%s147] sm:%s82]
    %s150 = ssub.s32 4, 1
    %s151 = scalar_lea.vmem [#allocation0], 22
    %152 = vst [vmem:[%s151] sm:%s150] %v148
    %s153 = scalar_lea.vmem [#allocation2], 96
    %v154 = vld [vmem:[%s153] sm:%s82]
    %s156 = ssub.s32 4, 1
    %s157 = scalar_lea.vmem [#allocation0], 24
    %158 = vst [vmem:[%s157] sm:%s156] %v154
    %s159 = scalar_lea.vmem [#allocation2], 104
    %v160 = vld [vmem:[%s159] sm:%s82]
    %s162 = ssub.s32 4, 1
    %s163 = scalar_lea.vmem [#allocation0], 26
    %164 = vst [vmem:[%s163] sm:%s162] %v160
    %s165 = scalar_lea.vmem [#allocation2], 112
    %v166 = vld [vmem:[%s165] sm:%s82]
    %s168 = ssub.s32 4, 1
    %s169 = scalar_lea.vmem [#allocation0], 28
    %170 = vst [vmem:[%s169] sm:%s168] %v166
    %s171 = scalar_lea.vmem [#allocation2], 120
    %v172 = vld [vmem:[%s171] sm:%s82]
    %s174 = ssub.s32 4, 1
    %s175 = scalar_lea.vmem [#allocation0], 30
    %176 = vst [vmem:[%s175] sm:%s174] %v172
    %s177 = scalar_lea.vmem [#allocation2], 128
    %v178 = vld [vmem:[%s177] sm:%s82]
    %s180 = ssub.s32 4, 1
    %s181 = scalar_lea.vmem [#allocation0], 32
    %182 = vst [vmem:[%s181] sm:%s180] %v178
    %s183 = scalar_lea.vmem [#allocation2], 136
    %v184 = vld [vmem:[%s183] sm:%s82]
    %s186 = ssub.s32 4, 1
    %s187 = scalar_lea.vmem [#allocation0], 34
    %188 = vst [vmem:[%s187] sm:%s186] %v184
    %s189 = scalar_lea.vmem [#allocation2], 144
    %v190 = vld [vmem:[%s189] sm:%s82]
    %s192 = ssub.s32 4, 1
    %s193 = scalar_lea.vmem [#allocation0], 36
    %194 = vst [vmem:[%s193] sm:%s192] %v190
    %s195 = scalar_lea.vmem [#allocation2], 152
    %v196 = vld [vmem:[%s195] sm:%s82]
    %s198 = ssub.s32 4, 1
    %s199 = scalar_lea.vmem [#allocation0], 38
    %200 = vst [vmem:[%s199] sm:%s198] %v196
    %s201 = scalar_lea.vmem [#allocation2], 160
    %v202 = vld [vmem:[%s201] sm:%s82]
    %s204 = ssub.s32 4, 1
    %s205 = scalar_lea.vmem [#allocation0], 40
    %206 = vst [vmem:[%s205] sm:%s204] %v202
    %s207 = scalar_lea.vmem [#allocation2], 168
    %v208 = vld [vmem:[%s207] sm:%s82]
    %s210 = ssub.s32 4, 1
    %s211 = scalar_lea.vmem [#allocation0], 42
    %212 = vst [vmem:[%s211] sm:%s210] %v208
    %s213 = scalar_lea.vmem [#allocation2], 176
    %v214 = vld [vmem:[%s213] sm:%s82]
    %s216 = ssub.s32 4, 1
    %s217 = scalar_lea.vmem [#allocation0], 44
    %218 = vst [vmem:[%s217] sm:%s216] %v214
    %s219 = scalar_lea.vmem [#allocation2], 184
    %v220 = vld [vmem:[%s219] sm:%s82]
    %s222 = ssub.s32 4, 1
    %s223 = scalar_lea.vmem [#allocation0], 46
    %224 = vst [vmem:[%s223] sm:%s222] %v220
    %s225 = scalar_lea.vmem [#allocation2], 192
    %v226 = vld [vmem:[%s225] sm:%s82]
    %s228 = ssub.s32 4, 1
    %s229 = scalar_lea.vmem [#allocation0], 48
    %230 = vst [vmem:[%s229] sm:%s228] %v226
    %s231 = scalar_lea.vmem [#allocation2], 200
    %v232 = vld [vmem:[%s231] sm:%s82]
    %s234 = ssub.s32 4, 1
    %s235 = scalar_lea.vmem [#allocation0], 50
    %236 = vst [vmem:[%s235] sm:%s234] %v232
    %s237 = scalar_lea.vmem [#allocation2], 208
    %v238 = vld [vmem:[%s237] sm:%s82]
    %s240 = ssub.s32 4, 1
    %s241 = scalar_lea.vmem [#allocation0], 52
    %242 = vst [vmem:[%s241] sm:%s240] %v238
    %s243 = scalar_lea.vmem [#allocation2], 216
    %v244 = vld [vmem:[%s243] sm:%s82]
    %s246 = ssub.s32 4, 1
    %s247 = scalar_lea.vmem [#allocation0], 54
    %248 = vst [vmem:[%s247] sm:%s246] %v244
    %s249 = scalar_lea.vmem [#allocation2], 224
    %v250 = vld [vmem:[%s249] sm:%s82]
    %s252 = ssub.s32 4, 1
    %s253 = scalar_lea.vmem [#allocation0], 56
    %254 = vst [vmem:[%s253] sm:%s252] %v250
    %s255 = scalar_lea.vmem [#allocation2], 232
    %v256 = vld [vmem:[%s255] sm:%s82]
    %s258 = ssub.s32 4, 1
    %s259 = scalar_lea.vmem [#allocation0], 58
    %260 = vst [vmem:[%s259] sm:%s258] %v256
    %s261 = scalar_lea.vmem [#allocation2], 240
    %v262 = vld [vmem:[%s261] sm:%s82]
    %s264 = ssub.s32 4, 1
    %s265 = scalar_lea.vmem [#allocation0], 60
    %266 = vst [vmem:[%s265] sm:%s264] %v262
    %s267 = scalar_lea.vmem [#allocation2], 248
    %v268 = vld [vmem:[%s267] sm:%s82]
    %s270 = ssub.s32 4, 1
    %s271 = scalar_lea.vmem [#allocation0], 62
    %272 = vst [vmem:[%s271] sm:%s270] %v268
    %274 = vsyncadd [#allocation1], 0
    %s276 = sshll.u32 [#allocation0], 4
    %s277 = int_to_ptr.vmem [resolvable:$true] %s276
    %s278 = sshll.u32 %s1, 4
    %s279 = int_to_ptr.hbm [resolvable:$true] %s278
    %281 = dma.vmem_to_hbm [thread:$0]  %s277, 1024, %s279, [#allocation1]
    %283 = dma.done [#allocation1], 1024
    %284 = vsyncpa [#allocation1], 1

// kernel: s2s_gru_forward.4
$region0: #{s2s_gru_forward.4}
  #allocation0 [shape = 'u32[]', space=smem, size = 0x4, offset = 0x4, fixed_abs, tag = 'smem constant byte address 0x4 - core index']
  #allocation1 [shape = 'u32[72,128]{1,0:T(1,128)}', space=vmem, size = 0x9000, scoped, tag = 'internal scratch']
  %s0 = inlined_call_operand.vmem [shape: f32[2,8,2,384], index: 0, kind: input, shape index: {}]
  %s1 = inlined_call_operand.vmem [shape: f32[2,2,128], index: 1, kind: input, shape index: {}]
  %s2 = inlined_call_operand.vmem [shape: bf16[2,128,384], index: 2, kind: input, shape index: {}]
  %s3 = inlined_call_operand.vmem [shape: f32[2,1,128], index: 3, kind: input, shape index: {}]
  %s4 = inlined_call_operand.vmem [shape: f32[2,8,2,128], index: 4, kind: output, shape index: {0}]
  %s5 = inlined_call_operand.hbm [shape: f32[2,2,128], index: 5, kind: output, shape index: {1}]
  %6 = xla_tuple %s4, %s5
  %s7 = sld [smem:[#allocation0]]
  $region61: #{s2s_gru_forward.4} parent=0
    _
  %s9 = ssub.s32 1, %s7
  %s10 = scalar_select 0, %s9, %s7
  $region1: #{s2s_gru_forward.4} parent=0
    #allocation2 [shape = 'u8[2048]{0}', space=vmem, size = 0x800, scoped, tag = 'output window, operand 1']
    #allocation3 [shape = 's32[2]{0}', space=sflag, size = 0x8, scoped, tag = 'scoped memory for s2s_gru_forward.4']
    %11 = vsyncpa [#allocation3], 0
    %s12 = scalar_lea.sflag [#allocation3], 1
    %13 = vsyncpa %s12, 0
    loop: start=0, step=1, limit=18
    $region2: #{s2s_gru_forward.4} parent=1 // loop_pre_header
      _
    $region3: #{s2s_gru_forward.4} parent=1 // loop_header
      %s15 = sphi 0, %s19
      %p16 = scmp.ge.s32.totalorder %s15, 18
      %s22 = sphi 0, %s34
      %s23 = sphi 0, %s30
      %s24 = sphi 0, %s22
      %s25 = sphi 0, %s23
      %s26 = sphi 0, %s24
      %s27 = sphi 0, %s25
      %s39 = sphi 0, %s41
      %s42 = sphi 0, %s39
      %s43 = sphi 0, %s42
      %s59 = sphi 0, %s43
      %s65 = sphi 0, %s67
      %s68 = sphi 0, %s65
      %s69 = sphi 0, %s68
      %s85 = sphi 0, %s69
      %s91 = sphi 0, %s93
      %s94 = sphi 0, %s91
      %s95 = sphi 0, %s94
      %s111 = sphi 0, %s95
      %s117 = sphi 0, %s119
      %s120 = sphi 0, %s117
      %s121 = sphi 0, %s120
      %s137 = sphi 0, %s121
      %s145 = sphi 0, %s147
      %s148 = sphi 0, %s145
      %s149 = sphi 0, %s148
      %s165 = sphi 0, %s149
      %s171 = sphi 0, %s173
      %s174 = sphi 0, %s171
      %s175 = sphi 0, %s174
      %s191 = sphi 0, %s175
    $region4: #{s2s_gru_forward.4} parent=1 // loop_header_branch
      %18 = sbr.rel (%p16) target = $region8
    $region5: #{s2s_gru_forward.4} parent=1 // loop_body
      %s20 = ssub.s32 %s15, 1
      %s21 = ssub.s32 %s15, 2
      %s28 = sadd.s32 1, %s23
      %p29 = scmp.ge.s32.totalorder %s28, 8
      %s30 = scalar_select %p29, 0, %s28
      %s31 = sadd.s32 1, %s22
      %s32 = scalar_select %p29, %s31, %s22
      %p33 = scmp.ge.s32.totalorder %s32, 2
      %s34 = scalar_select %p33, 0, %s32
      %s35 = ssub.s32 %s22, %s34
      %s36 = ssub.s32 %s23, %s30
      %s37 = sor.u32 %s35, %s36
      %p38 = scmp.eq.s32.totalorder %s37, 0
      %s40 = sadd.s32 %s39, 1
      %s41 = scalar_select %p38, %s39, %s40
      %p44 = pneg %p38
      %p45 = scmp.eq.s32.totalorder %s15, 15
      %p46 = por %p44, %p45
      %p47 = scmp.ne.s32.totalorder %s39, %s42
      %p48 = scmp.eq.s32.totalorder %s15, 0
      %p49 = por %p47, %p48
      %p50 = scmp.ne.s32.totalorder %s39, %s42
      %p51 = scmp.eq.s32.totalorder %s20, 15
      %p52 = por %p50, %p51
      %p53 = scmp.ne.s32.totalorder %s42, %s43
      %p54 = scmp.eq.s32.totalorder %s20, 0
      %p55 = por %p53, %p54
      %p56 = scmp.ne.s32.totalorder %s42, %s43
      %p57 = scmp.eq.s32.totalorder %s21, 15
      %p58 = por %p56, %p57
      %p60 = scmp.ne.s32.totalorder %s43, %s59
      %p61 = scmp.eq.s32.totalorder %s21, 0
      %p62 = por %p60, %p61
      %s63 = ssub.s32 %s22, %s34
      %p64 = scmp.eq.s32.totalorder %s63, 0
      %s66 = sadd.s32 %s65, 1
      %s67 = scalar_select %p64, %s65, %s66
      %p70 = pneg %p64
      %p71 = scmp.eq.s32.totalorder %s15, 15
      %p72 = por %p70, %p71
      %p73 = scmp.ne.s32.totalorder %s65, %s68
      %p74 = scmp.eq.s32.totalorder %s15, 0
      %p75 = por %p73, %p74
      %p76 = scmp.ne.s32.totalorder %s65, %s68
      %p77 = scmp.eq.s32.totalorder %s20, 15
      %p78 = por %p76, %p77
      %p79 = scmp.ne.s32.totalorder %s68, %s69
      %p80 = scmp.eq.s32.totalorder %s20, 0
      %p81 = por %p79, %p80
      %p82 = scmp.ne.s32.totalorder %s68, %s69
      %p83 = scmp.eq.s32.totalorder %s21, 15
      %p84 = por %p82, %p83
      %p86 = scmp.ne.s32.totalorder %s69, %s85
      %p87 = scmp.eq.s32.totalorder %s21, 0
      %p88 = por %p86, %p87
      %s89 = ssub.s32 %s22, %s34
      %p90 = scmp.eq.s32.totalorder %s89, 0
      %s92 = sadd.s32 %s91, 1
      %s93 = scalar_select %p90, %s91, %s92
      %p96 = pneg %p90
      %p97 = scmp.eq.s32.totalorder %s15, 15
      %p98 = por %p96, %p97
      %p99 = scmp.ne.s32.totalorder %s91, %s94
      %p100 = scmp.eq.s32.totalorder %s15, 0
      %p101 = por %p99, %p100
      %p102 = scmp.ne.s32.totalorder %s91, %s94
      %p103 = scmp.eq.s32.totalorder %s20, 15
      %p104 = por %p102, %p103
      %p105 = scmp.ne.s32.totalorder %s94, %s95
      %p106 = scmp.eq.s32.totalorder %s20, 0
      %p107 = por %p105, %p106
      %p108 = scmp.ne.s32.totalorder %s94, %s95
      %p109 = scmp.eq.s32.totalorder %s21, 15
      %p110 = por %p108, %p109
      %p112 = scmp.ne.s32.totalorder %s95, %s111
      %p113 = scmp.eq.s32.totalorder %s21, 0
      %p114 = por %p112, %p113
      %s115 = ssub.s32 %s22, %s34
      %p116 = scmp.eq.s32.totalorder %s115, 0
      %s118 = sadd.s32 %s117, 1
      %s119 = scalar_select %p116, %s117, %s118
      %p122 = pneg %p116
      %p123 = scmp.eq.s32.totalorder %s15, 15
      %p124 = por %p122, %p123
      %p125 = scmp.ne.s32.totalorder %s117, %s120
      %p126 = scmp.eq.s32.totalorder %s15, 0
      %p127 = por %p125, %p126
      %p128 = scmp.ne.s32.totalorder %s117, %s120
      %p129 = scmp.eq.s32.totalorder %s20, 15
      %p130 = por %p128, %p129
      %p131 = scmp.ne.s32.totalorder %s120, %s121
      %p132 = scmp.eq.s32.totalorder %s20, 0
      %p133 = por %p131, %p132
      %p134 = scmp.ne.s32.totalorder %s120, %s121
      %p135 = scmp.eq.s32.totalorder %s21, 15
      %p136 = por %p134, %p135
      %p138 = scmp.ne.s32.totalorder %s121, %s137
      %p139 = scmp.eq.s32.totalorder %s21, 0
      %p140 = por %p138, %p139
      %s141 = ssub.s32 %s22, %s34
      %s142 = ssub.s32 %s23, %s30
      %s143 = sor.u32 %s141, %s142
      %p144 = scmp.eq.s32.totalorder %s143, 0
      %s146 = sadd.s32 %s145, 1
      %s147 = scalar_select %p144, %s145, %s146
      %p150 = pneg %p144
      %p151 = scmp.eq.s32.totalorder %s15, 15
      %p152 = por %p150, %p151
      %p153 = scmp.ne.s32.totalorder %s145, %s148
      %p154 = scmp.eq.s32.totalorder %s15, 0
      %p155 = por %p153, %p154
      %p156 = scmp.ne.s32.totalorder %s145, %s148
      %p157 = scmp.eq.s32.totalorder %s20, 15
      %p158 = por %p156, %p157
      %p159 = scmp.ne.s32.totalorder %s148, %s149
      %p160 = scmp.eq.s32.totalorder %s20, 0
      %p161 = por %p159, %p160
      %p162 = scmp.ne.s32.totalorder %s148, %s149
      %p163 = scmp.eq.s32.totalorder %s21, 15
      %p164 = por %p162, %p163
      %p166 = scmp.ne.s32.totalorder %s149, %s165
      %p167 = scmp.eq.s32.totalorder %s21, 0
      %p168 = por %p166, %p167
      %s169 = ssub.s32 %s22, %s34
      %p170 = scmp.eq.s32.totalorder %s169, 0
      %s172 = sadd.s32 %s171, 1
      %s173 = scalar_select %p170, %s171, %s172
      %p176 = pneg %p170
      %p177 = scmp.eq.s32.totalorder %s15, 15
      %p178 = por %p176, %p177
      %p179 = scmp.ne.s32.totalorder %s171, %s174
      %p180 = scmp.eq.s32.totalorder %s15, 0
      %p181 = por %p179, %p180
      %p182 = scmp.ne.s32.totalorder %s171, %s174
      %p183 = scmp.eq.s32.totalorder %s20, 15
      %p184 = por %p182, %p183
      %p185 = scmp.ne.s32.totalorder %s174, %s175
      %p186 = scmp.eq.s32.totalorder %s20, 0
      %p187 = por %p185, %p186
      %p188 = scmp.ne.s32.totalorder %s174, %s175
      %p189 = scmp.eq.s32.totalorder %s21, 15
      %p190 = por %p188, %p189
      %p192 = scmp.ne.s32.totalorder %s175, %s191
      %p193 = scmp.eq.s32.totalorder %s21, 0
      %p194 = por %p192, %p193
      %p195 = scmp.le.s32.totalorder 1, %s15
      %p196 = scmp.lt.s32.totalorder %s15, 17
      %p197 = pnand %p195, %p196
      %p198 = pneg %p197
      // Predicated region
      $region9: #{s2s_gru_forward.4} parent=5 // pred_check
        _
      $region10: #{s2s_gru_forward.4} parent=5 // pred_check_branch
        %200 = sbr.rel (%p197) target = $region12
      $region11: #{s2s_gru_forward.4} parent=5 // pred_region
        %s201 = ssub.s32 %s15, 1
      $region12: #{s2s_gru_forward.4} parent=5 // pred_fallthru
        _
      %p202 = scmp.lt.s32.totalorder %s15, 16
      // Predicated region
      $region13: #{s2s_gru_forward.4} parent=5 // pred_check
        %p203 = pneg %p202
      $region14: #{s2s_gru_forward.4} parent=5 // pred_check_branch
        %205 = sbr.rel (%p203) target = $region16
      $region15: #{s2s_gru_forward.4} parent=5 // pred_region
        // Predicated region
        $region17: #{s2s_gru_forward.4} parent=15 // pred_check
          %p206 = pneg %p49
        $region18: #{s2s_gru_forward.4} parent=15 // pred_check_branch
          %208 = sbr.rel (%p206) target = $region20
        $region19: #{s2s_gru_forward.4} parent=15 // pred_region
          %p209 = scmp.lt.s32.totalorder %s22, 1
          %s210 = scalar_select %p209, %s22, 1
          %p211 = scmp.lt.s32.totalorder %s23, 7
          %s212 = scalar_select %p211, %s23, 7
          %s213 = smul.addr %s212, 3
          %s214 = smul.addr %s210, 24
          %s215 = sadd.s32 %s213, %s214
          %s216 = smul.addr %s215, 2
          %s217 = scalar_lea.vmem %s0, %s216
        $region20: #{s2s_gru_forward.4} parent=15 // pred_fallthru
          _
        // Predicated region
        $region21: #{s2s_gru_forward.4} parent=15 // pred_check
          %p218 = pneg %p75
        $region22: #{s2s_gru_forward.4} parent=15 // pred_check_branch
          %220 = sbr.rel (%p218) target = $region24
        $region23: #{s2s_gru_forward.4} parent=15 // pred_region
          %p221 = scmp.lt.s32.totalorder %s22, 1
          %s222 = scalar_select %p221, %s22, 1
          %s223 = smul.addr %s222, 2
          %s224 = scalar_lea.vmem %s1, %s223
        $region24: #{s2s_gru_forward.4} parent=15 // pred_fallthru
          _
        // Predicated region
        $region25: #{s2s_gru_forward.4} parent=15 // pred_check
          %p225 = pneg %p101
        $region26: #{s2s_gru_forward.4} parent=15 // pred_check_branch
          %227 = sbr.rel (%p225) target = $region28
        $region27: #{s2s_gru_forward.4} parent=15 // pred_region
          %p228 = scmp.lt.s32.totalorder %s22, 1
          %s229 = scalar_select %p228, %s22, 1
          %s230 = smul.addr %s229, 48
          %s231 = smul.addr %s230, 4
          %s232 = scalar_lea.vmem %s2, %s231
        $region28: #{s2s_gru_forward.4} parent=15 // pred_fallthru
          _
        // Predicated region
        $region29: #{s2s_gru_forward.4} parent=15 // pred_check
          %p233 = pneg %p127
        $region30: #{s2s_gru_forward.4} parent=15 // pred_check_branch
          %235 = sbr.rel (%p233) target = $region32
        $region31: #{s2s_gru_forward.4} parent=15 // pred_region
          %p236 = scmp.lt.s32.totalorder %s22, 1
          %s237 = scalar_select %p236, %s22, 1
          %s238 = scalar_lea.vmem %s3, %s237
        $region32: #{s2s_gru_forward.4} parent=15 // pred_fallthru
          _
      $region16: #{s2s_gru_forward.4} parent=5 // pred_fallthru
        _
      %p239 = scmp.le.s32.totalorder 1, %s15
      %p240 = scmp.lt.s32.totalorder %s15, 17
      %p241 = pnand %p239, %p240
      %p242 = pneg %p241
      // Predicated region
      $region33: #{s2s_gru_forward.4} parent=5 // pred_check
        _
      $region34: #{s2s_gru_forward.4} parent=5 // pred_check_branch
        %244 = sbr.rel (%p241) target = $region36
      $region35: #{s2s_gru_forward.4} parent=5 // pred_region
        %s245 = ssub.s32 %s15, 1
        %p246 = scmp.lt.s32.totalorder %s24, 1
        %s247 = scalar_select %p246, %s24, 1
        %p248 = scmp.lt.s32.totalorder %s25, 7
        %s249 = scalar_select %p248, %s25, 7
        %s250 = smul.addr %s249, 3
        %s251 = smul.addr %s247, 24
        %s252 = sadd.s32 %s250, %s251
        %s253 = smul.addr %s252, 2
        %s254 = scalar_lea.vmem %s0, %s253
        %p255 = pneg %p55
        %p256 = pneg %p52
        %p257 = scmp.lt.s32.totalorder %s24, 1
        %s258 = scalar_select %p257, %s24, 1
        %s259 = smul.addr %s258, 2
        %s260 = scalar_lea.vmem %s1, %s259
        %p261 = pneg %p81
        %p262 = pneg %p78
        %p263 = scmp.lt.s32.totalorder %s24, 1
        %s264 = scalar_select %p263, %s24, 1
        %s265 = smul.addr %s264, 48
        %s266 = smul.addr %s265, 4
        %s267 = scalar_lea.vmem %s2, %s266
        %p268 = pneg %p107
        %p269 = pneg %p104
        %p270 = scmp.lt.s32.totalorder %s24, 1
        %s271 = scalar_select %p270, %s24, 1
        %s272 = scalar_lea.vmem %s3, %s271
        %p273 = pneg %p133
        %p274 = pneg %p130
        %p275 = pneg %p161
        %p276 = pneg %p158
        %p277 = scmp.lt.s32.totalorder %s24, 1
        %s278 = scalar_select %p277, %s24, 1
        %p279 = scmp.lt.s32.totalorder %s25, 7
        %s280 = scalar_select %p279, %s25, 7
        %s281 = smul.addr %s278, 8
        %s282 = sadd.s32 %s280, %s281
        %s283 = smul.addr %s282, 2
        %s284 = scalar_lea.vmem %s4, %s283
        %p285 = pneg %p187
        %p286 = pneg %p184
        %s287 = sand.u32 %s174, 1
        %s288 = scalar_lea.sflag [#allocation3], %s287
        %s289 = sand.u32 %s174, 1
        %s290 = smul.addr %s289, 2
        %s291 = scalar_lea.vmem [#allocation2], %s290
        %p292 = scmp.lt.s32.totalorder %s24, 1
        %s293 = scalar_select %p292, %s24, 1
        %p294 = scmp.lt.s32.totalorder %s25, 7
        %s295 = scalar_select %p294, %s25, 7
        %s296 = smul.addr %s295, 3
        %s297 = smul.addr %s293, 24
        %s298 = sadd.s32 %s296, %s297
        %s299 = smul.addr %s298, 2
        %s300 = scalar_lea.vmem %s0, %s299
        %p301 = scmp.lt.s32.totalorder %s24, 1
        %s302 = scalar_select %p301, %s24, 1
        %s303 = smul.addr %s302, 2
        %s304 = scalar_lea.vmem %s1, %s303
        %p305 = scmp.lt.s32.totalorder %s24, 1
        %s306 = scalar_select %p305, %s24, 1
        %s307 = smul.addr %s306, 48
        %s308 = smul.addr %s307, 4
        %s309 = scalar_lea.vmem %s2, %s308
        %p310 = scmp.lt.s32.totalorder %s24, 1
        %s311 = scalar_select %p310, %s24, 1
        %s312 = scalar_lea.vmem %s3, %s311
        %p313 = scmp.lt.s32.totalorder %s24, 1
        %s314 = scalar_select %p313, %s24, 1
        %p315 = scmp.lt.s32.totalorder %s25, 7
        %s316 = scalar_select %p315, %s25, 7
        %s317 = smul.addr %s314, 8
        %s318 = sadd.s32 %s316, %s317
        %s319 = smul.addr %s318, 2
        %s320 = scalar_lea.vmem %s4, %s319
        %p321 = scmp.eq.s32.totalorder %s25, 0
        // Predicated region
        $region37: #{s2s_gru_forward.4} parent=35 // pred_check
          %p322 = pneg %p321
        $region38: #{s2s_gru_forward.4} parent=35 // pred_check_branch
          %324 = sbr.rel (%p322) target = $region40
        $region39: #{s2s_gru_forward.4} parent=35 // pred_region
          %v325 = vld [vmem:[%s304] sm:$0x3]
          %326 = vst [vmem:[%s291] sm:$0x3] %v325
        $region40: #{s2s_gru_forward.4} parent=35 // pred_fallthru
          _
        %v327 = vld [vmem:[%s291] sm:$0x3]
        %v328 = vld [vmem:[%s300] sm:$0x3f]
        %v329 = vpack.c.bf16 %v327, %v327
        %v330 = vld [vmem:[%s309] sm:$0xff]
        %v331 = vld [vmem:[%s309 + $0x8] sm:$0xf]
        %v332 = vld [vmem:[%s309 + $0xc] sm:$0xff]
        %v333 = vld [vmem:[%s309 + $0x14] sm:$0xf]
        %v334 = vld [vmem:[%s309 + $0x18] sm:$0xff]
        %v335 = vld [vmem:[%s309 + $0x20] sm:$0xf]
        %v336 = vld [vmem:[%s309 + $0x24] sm:$0xff]
        %v337 = vld [vmem:[%s309 + $0x2c] sm:$0xf]
        %v338 = vld [vmem:[%s309 + $0x30] sm:$0xff]
        %v339 = vld [vmem:[%s309 + $0x38] sm:$0xf]
        %v340 = vld [vmem:[%s309 + $0x3c] sm:$0xff]
        %v341 = vld [vmem:[%s309 + $0x44] sm:$0xf]
        %v342 = vld [vmem:[%s309 + $0x48] sm:$0xff]
        %v343 = vld [vmem:[%s309 + $0x50] sm:$0xf]
        %v344 = vld [vmem:[%s309 + $0x54] sm:$0xff]
        %v345 = vld [vmem:[%s309 + $0x5c] sm:$0xf]
        %v346 = vld [vmem:[%s309 + $0x60] sm:$0xff]
        %v347 = vld [vmem:[%s309 + $0x68] sm:$0xf]
        %v348 = vld [vmem:[%s309 + $0x6c] sm:$0xff]
        %v349 = vld [vmem:[%s309 + $0x74] sm:$0xf]
        %v350 = vld [vmem:[%s309 + $0x78] sm:$0xff]
        %v351 = vld [vmem:[%s309 + $0x80] sm:$0xf]
        %v352 = vld [vmem:[%s309 + $0x84] sm:$0xff]
        %v353 = vld [vmem:[%s309 + $0x8c] sm:$0xf]
        %v354 = vld [vmem:[%s309 + $0x90] sm:$0xff]
        %v355 = vld [vmem:[%s309 + $0x98] sm:$0xf]
        %v356 = vld [vmem:[%s309 + $0x9c] sm:$0xff]
        %v357 = vld [vmem:[%s309 + $0xa4] sm:$0xf]
        %v358 = vld [vmem:[%s309 + $0xa8] sm:$0xff]
        %v359 = vld [vmem:[%s309 + $0xb0] sm:$0xf]
        %v360 = vld [vmem:[%s309 + $0xb4] sm:$0xff]
        %v361 = vld [vmem:[%s309 + $0xbc] sm:$0xf]
        %v394 = vunpack.c.l.b16 %v330
        %v395 = vunpack.c.h.b16 %v330
        %v396 = vunpack.c.l.b16 %v331
        %v397 = vunpack.c.l.b16 %v332
        %v398 = vunpack.c.h.b16 %v332
        %v399 = vunpack.c.l.b16 %v333
        %v400 = vunpack.c.l.b16 %v334
        %v401 = vunpack.c.h.b16 %v334
        %v402 = vunpack.c.l.b16 %v335
        %v403 = vunpack.c.l.b16 %v336
        %v404 = vunpack.c.h.b16 %v336
        %v405 = vunpack.c.l.b16 %v337
        %v406 = vunpack.c.l.b16 %v338
        %v407 = vunpack.c.h.b16 %v338
        %v408 = vunpack.c.l.b16 %v339
        %v409 = vunpack.c.l.b16 %v340
        %v410 = vunpack.c.h.b16 %v340
        %v411 = vunpack.c.l.b16 %v341
        %v412 = vunpack.c.l.b16 %v342
        %v413 = vunpack.c.h.b16 %v342
        %v414 = vunpack.c.l.b16 %v343
        %v415 = vunpack.c.l.b16 %v344
        %v416 = vunpack.c.h.b16 %v344
        %v417 = vunpack.c.l.b16 %v345
        %v418 = vunpack.c.l.b16 %v346
        %v419 = vunpack.c.h.b16 %v346
        %v420 = vunpack.c.l.b16 %v347
        %v421 = vunpack.c.l.b16 %v348
        %v422 = vunpack.c.h.b16 %v348
        %v423 = vunpack.c.l.b16 %v349
        %v424 = vunpack.c.l.b16 %v350
        %v425 = vunpack.c.h.b16 %v350
        %v426 = vunpack.c.l.b16 %v351
        %v427 = vunpack.c.l.b16 %v352
        %v428 = vunpack.c.h.b16 %v352
        %v429 = vunpack.c.l.b16 %v353
        %v430 = vunpack.c.l.b16 %v354
        %v431 = vunpack.c.h.b16 %v354
        %v432 = vunpack.c.l.b16 %v355
        %v433 = vunpack.c.l.b16 %v356
        %v434 = vunpack.c.h.b16 %v356
        %v435 = vunpack.c.l.b16 %v357
        %v436 = vunpack.c.l.b16 %v358
        %v437 = vunpack.c.h.b16 %v358
        %v438 = vunpack.c.l.b16 %v359
        %v439 = vunpack.c.l.b16 %v360
        %v440 = vunpack.c.h.b16 %v360
        %v441 = vunpack.c.l.b16 %v361
        %v442 = vpack.c.b16 %v397, %v394
        %v443 = vpack.c.b16 %v398, %v395
        %v444 = vpack.c.b16 %v399, %v396
        %v445 = vpack.c.b16 %v403, %v400
        %v446 = vpack.c.b16 %v404, %v401
        %v447 = vpack.c.b16 %v405, %v402
        %v448 = vpack.c.b16 %v409, %v406
        %v449 = vpack.c.b16 %v410, %v407
        %v450 = vpack.c.b16 %v411, %v408
        %v451 = vpack.c.b16 %v415, %v412
        %v452 = vpack.c.b16 %v416, %v413
        %v453 = vpack.c.b16 %v417, %v414
        %v454 = vpack.c.b16 %v421, %v418
        %v455 = vpack.c.b16 %v422, %v419
        %v456 = vpack.c.b16 %v423, %v420
        %v457 = vpack.c.b16 %v427, %v424
        %v458 = vpack.c.b16 %v428, %v425
        %v459 = vpack.c.b16 %v429, %v426
        %v460 = vpack.c.b16 %v433, %v430
        %v461 = vpack.c.b16 %v434, %v431
        %v462 = vpack.c.b16 %v435, %v432
        %v463 = vpack.c.b16 %v439, %v436
        %v464 = vpack.c.b16 %v440, %v437
        %v465 = vpack.c.b16 %v441, %v438
        %490 = vmatpush.bf16.msra.mxu0 %v463
        %491 = vmatpush.bf16.msra.mxu0 %v460
        %492 = vmatpush.bf16.msra.mxu0 %v457
        %493 = vmatpush.bf16.msra.mxu0 %v454
        %494 = vmatpush.bf16.msra.mxu0 %v451
        %495 = vmatpush.bf16.msra.mxu0 %v448
        %496 = vmatpush.bf16.msra.mxu0 %v445
        %497 = vmatpush.bf16.msra.mxu0 %v442
        %498 = vmatmul.bf16.gmra.mxu0 %v329
        %v499 = vpop.f32.mrf.mxu0
        %v500 = vadd.f32 0.0, %v499
        %v501 = vpop.f32.mrf.mxu0
        %502 = vdwg.mxu0
        %503 = vmatpush.bf16.msra.mxu0 %v464
        %504 = vmatpush.bf16.msra.mxu0 %v461
        %505 = vmatpush.bf16.msra.mxu0 %v458
        %506 = vmatpush.bf16.msra.mxu0 %v455
        %507 = vmatpush.bf16.msra.mxu0 %v452
        %508 = vmatpush.bf16.msra.mxu0 %v449
        %509 = vmatpush.bf16.msra.mxu0 %v446
        %510 = vmatpush.bf16.msra.mxu0 %v443
        %511 = vmatmul.bf16.gmra.mxu0 %v329
        %v512 = vpop.f32.mrf.mxu0
        %v513 = vadd.f32 0.0, %v512
        %v514 = vpop.f32.mrf.mxu0
        %515 = vdwg.mxu0
        %516 = vmatpush.bf16.msra.mxu0 %v465
        %517 = vmatpush.bf16.msra.mxu0 %v462
        %518 = vmatpush.bf16.msra.mxu0 %v459
        %519 = vmatpush.bf16.msra.mxu0 %v456
        %520 = vmatpush.bf16.msra.mxu0 %v453
        %521 = vmatpush.bf16.msra.mxu0 %v450
        %522 = vmatpush.bf16.msra.mxu0 %v447
        %523 = vmatpush.bf16.msra.mxu0 %v444
        %524 = vmatmul.bf16.gmra.mxu0 %v329
        %v525 = vpop.f32.mrf.mxu0
        %v526 = vadd.f32 0.0, %v525
        %v527 = vpop.f32.mrf.mxu0
        %528 = vdwg.mxu0
        %v529 = vadd.f32 %v328, %v500
        %v530 = vxor.u32 %v529, 2147483648
        %v531 = vmul.f32 %v530, 1.442695
        %v532 = vpow.pop %v531
        %v533 = vadd.f32 %v532, 1.0
        %v534 = vrcp.pop %v533
        %v535 = vmul.f32 %v533, %v534
        %v536 = vsub.f32 1.0, %v535
        %v537 = vmul.f32 %v534, %v536
        %v538 = vadd.f32 %v534, %v537
        %vm539 = vweird.f32 %v533
        %vm540 = vweird.f32 %v534
        %vm541 = vmor %vm539, %vm540
        %v542 = vsel %vm541, %v534, %v538
        %v543 = vand.u32 2147483647, %v533
        %vm544 = vcmp.eq.f32.partialorder %v543, 8.507059e+37
        %v545 = vand.u32 %v533, 2147483648
        %v546 = vor.u32 1.1754944e-38, %v545
        %v547 = vsel %vm544, %v546, %v542
        %v548 = vmul.f32 1.0, %v547
        %v550 = vrot.slane %v328, 2
        %v552 = vadd.f32 %v550, %v513
        %v553 = vxor.u32 %v552, 2147483648
        %v554 = vmul.f32 %v553, 1.442695
        %v555 = vpow.pop %v554
        %v556 = vadd.f32 %v555, 1.0
        %v557 = vrcp.pop %v556
        %v558 = vmul.f32 %v556, %v557
        %v559 = vsub.f32 1.0, %v558
        %v560 = vmul.f32 %v557, %v559
        %v561 = vadd.f32 %v557, %v560
        %vm562 = vweird.f32 %v556
        %vm563 = vweird.f32 %v557
        %vm564 = vmor %vm562, %vm563
        %v565 = vsel %vm564, %v557, %v561
        %v566 = vand.u32 2147483647, %v556
        %vm567 = vcmp.eq.f32.partialorder %v566, 8.507059e+37
        %v568 = vand.u32 %v556, 2147483648
        %v569 = vor.u32 1.1754944e-38, %v568
        %v570 = vsel %vm567, %v569, %v565
        %v571 = vmul.f32 1.0, %v570
        %v572 = vld [vmem:[%s312] sm:$0x1]
        %v574 = vperm.slane %v572, 0
        %v576 = vadd.f32 %v526, %v574
        %v577 = vmul.f32 %v548, %v576
        %v578 = vrot.slane %v328, 4
        %v580 = vadd.f32 %v578, %v577
        %v581 = vtanh.pop %v580
        %v582 = vsub.f32 1.0, %v571
        %v583 = vmul.f32 %v582, %v581
        %v584 = vmul.f32 %v571, %v327
        %v585 = vadd.f32 %v583, %v584
        %586 = vst [vmem:[%s291] sm:$0x3] %v585
        %587 = vst [vmem:[%s320] sm:$0x3] %v585
        %p588 = scmp.lt.s32.totalorder %s24, 1
        %s589 = scalar_select %p588, %s24, 1
        %p590 = scmp.lt.s32.totalorder %s25, 7
        %s591 = scalar_select %p590, %s25, 7
        %s592 = smul.addr %s589, 8
        %s593 = sadd.s32 %s591, %s592
        %s594 = smul.addr %s593, 2
        %s595 = scalar_lea.vmem %s4, %s594
        %s596 = sand.u32 %s174, 1
        %s597 = scalar_lea.sflag [#allocation3], %s596
        %s598 = sand.u32 %s174, 1
        %s599 = smul.addr %s598, 2
        %s600 = scalar_lea.vmem [#allocation2], %s599
        // Predicated region
        $region41: #{s2s_gru_forward.4} parent=35 // pred_check
          %p601 = pneg %p158
        $region42: #{s2s_gru_forward.4} parent=35 // pred_check_branch
          %603 = sbr.rel (%p601) target = $region44
        $region43: #{s2s_gru_forward.4} parent=35 // pred_region
          _
        $region44: #{s2s_gru_forward.4} parent=35 // pred_fallthru
          _
        // Predicated region
        $region45: #{s2s_gru_forward.4} parent=35 // pred_check
          %p604 = pneg %p184
        $region46: #{s2s_gru_forward.4} parent=35 // pred_check_branch
          %606 = sbr.rel (%p604) target = $region48
        $region47: #{s2s_gru_forward.4} parent=35 // pred_region
          %608 = vsyncadd %s597, 0
          %s609 = smul.addr %s24, 2
          %s610 = scalar_lea.hbm %s5, %s609
          %s612 = sshll.u32 %s600, 4
          %s613 = int_to_ptr.vmem [resolvable:$true] %s612
          %s614 = sshll.u32 %s610, 4
          %s615 = int_to_ptr.hbm [resolvable:$true] %s614
          %617 = dma.vmem_to_hbm [thread:$0]  %s613, 32, %s615, %s597
        $region48: #{s2s_gru_forward.4} parent=35 // pred_fallthru
          _
      $region36: #{s2s_gru_forward.4} parent=5 // pred_fallthru
        _
      %p618 = scmp.le.s32.totalorder 2, %s15
      // Predicated region
      $region49: #{s2s_gru_forward.4} parent=5 // pred_check
        %p619 = pneg %p618
      $region50: #{s2s_gru_forward.4} parent=5 // pred_check_branch
        %621 = sbr.rel (%p619) target = $region52
      $region51: #{s2s_gru_forward.4} parent=5 // pred_region
        %s622 = ssub.s32 %s15, 2
        // Predicated region
        $region53: #{s2s_gru_forward.4} parent=51 // pred_check
          %p623 = pneg %p164
        $region54: #{s2s_gru_forward.4} parent=51 // pred_check_branch
          %625 = sbr.rel (%p623) target = $region56
        $region55: #{s2s_gru_forward.4} parent=51 // pred_region
          %p626 = scmp.lt.s32.totalorder %s26, 1
          %s627 = scalar_select %p626, %s26, 1
          %p628 = scmp.lt.s32.totalorder %s27, 7
          %s629 = scalar_select %p628, %s27, 7
          %s630 = smul.addr %s627, 8
          %s631 = sadd.s32 %s629, %s630
          %s632 = smul.addr %s631, 2
          %s633 = scalar_lea.vmem %s4, %s632
        $region56: #{s2s_gru_forward.4} parent=51 // pred_fallthru
          _
        // Predicated region
        $region57: #{s2s_gru_forward.4} parent=51 // pred_check
          %p634 = pneg %p190
        $region58: #{s2s_gru_forward.4} parent=51 // pred_check_branch
          %636 = sbr.rel (%p634) target = $region60
        $region59: #{s2s_gru_forward.4} parent=51 // pred_region
          %s637 = sand.u32 %s175, 1
          %s638 = scalar_lea.sflag [#allocation3], %s637
          %s639 = sand.u32 %s175, 1
          %s640 = smul.addr %s639, 2
          %s641 = scalar_lea.vmem [#allocation2], %s640
          %643 = dma.done %s638, 32
        $region60: #{s2s_gru_forward.4} parent=51 // pred_fallthru
          _
      $region52: #{s2s_gru_forward.4} parent=5 // pred_fallthru
        _
    $region6: #{s2s_gru_forward.4} parent=1 // loop_footer
      %s19 = sadd.s32 1, %s15
    $region7: #{s2s_gru_forward.4} parent=1 // loop_footer_branch
      %14 = sbr.rel target = $region3
    $region8: #{s2s_gru_forward.4} parent=1 // loop_exit
      _
    %644 = vsyncpa [#allocation3], 1
    %s645 = scalar_lea.sflag [#allocation3], 1
    %646 = vsyncpa %s645, 1

// kernel: s2s_gru_forward.3
$region0: #{s2s_gru_forward.3}
  #allocation0 [shape = 'u32[]', space=smem, size = 0x4, offset = 0x4, fixed_abs, tag = 'smem constant byte address 0x4 - core index']
  #allocation1 [shape = 'u32[72,128]{1,0:T(1,128)}', space=vmem, size = 0x9000, scoped, tag = 'internal scratch']
  %s0 = inlined_call_operand.vmem [shape: f32[1,8,2,384], index: 0, kind: input, shape index: {}]
  %s1 = inlined_call_operand.vmem [shape: f32[1,2,128], index: 1, kind: input, shape index: {}]
  %s2 = inlined_call_operand.vmem [shape: bf16[1,128,384], index: 2, kind: input, shape index: {}]
  %s3 = inlined_call_operand.vmem [shape: f32[1,1,128], index: 3, kind: input, shape index: {}]
  %s4 = inlined_call_operand.hbm [shape: f32[1,8,2,128], index: 4, kind: output, shape index: {0}]
  %s5 = inlined_call_operand.vmem [shape: f32[1,2,128], index: 5, kind: output, shape index: {1}]
  %6 = xla_tuple %s4, %s5
  %s7 = sld [smem:[#allocation0]]
  $region61: #{s2s_gru_forward.3} parent=0
    _
  %s9 = ssub.s32 1, %s7
  %s10 = scalar_select 0, %s9, %s7
  $region1: #{s2s_gru_forward.3} parent=0
    #allocation2 [shape = 'u8[2048]{0}', space=vmem, size = 0x800, scoped, tag = 'output window, operand 0']
    #allocation3 [shape = 's32[2]{0}', space=sflag, size = 0x8, scoped, tag = 'scoped memory for s2s_gru_forward.3']
    %11 = vsyncpa [#allocation3], 0
    %s12 = scalar_lea.sflag [#allocation3], 1
    %13 = vsyncpa %s12, 0
    loop: start=0, step=1, limit=10
    $region2: #{s2s_gru_forward.3} parent=1 // loop_pre_header
      _
    $region3: #{s2s_gru_forward.3} parent=1 // loop_header
      %s15 = sphi 0, %s19
      %p16 = scmp.ge.s32.totalorder %s15, 10
      %s22 = sphi 0, %s34
      %s23 = sphi 0, %s30
      %s24 = sphi 0, %s22
      %s25 = sphi 0, %s23
      %s26 = sphi 0, %s24
      %s27 = sphi 0, %s25
      %s39 = sphi 0, %s41
      %s42 = sphi 0, %s39
      %s43 = sphi 0, %s42
      %s59 = sphi 0, %s43
      %s65 = sphi 0, %s67
      %s68 = sphi 0, %s65
      %s69 = sphi 0, %s68
      %s85 = sphi 0, %s69
      %s91 = sphi 0, %s93
      %s94 = sphi 0, %s91
      %s95 = sphi 0, %s94
      %s111 = sphi 0, %s95
      %s117 = sphi 0, %s119
      %s120 = sphi 0, %s117
      %s121 = sphi 0, %s120
      %s137 = sphi 0, %s121
      %s145 = sphi 0, %s147
      %s148 = sphi 0, %s145
      %s149 = sphi 0, %s148
      %s165 = sphi 0, %s149
      %s171 = sphi 0, %s173
      %s174 = sphi 0, %s171
      %s175 = sphi 0, %s174
      %s191 = sphi 0, %s175
    $region4: #{s2s_gru_forward.3} parent=1 // loop_header_branch
      %18 = sbr.rel (%p16) target = $region8
    $region5: #{s2s_gru_forward.3} parent=1 // loop_body
      %s20 = ssub.s32 %s15, 1
      %s21 = ssub.s32 %s15, 2
      %s28 = sadd.s32 1, %s23
      %p29 = scmp.ge.s32.totalorder %s28, 8
      %s30 = scalar_select %p29, 0, %s28
      %s31 = sadd.s32 1, %s22
      %s32 = scalar_select %p29, %s31, %s22
      %p33 = scmp.ge.s32.totalorder %s32, 1
      %s34 = scalar_select %p33, 0, %s32
      %s35 = ssub.s32 %s22, %s34
      %s36 = ssub.s32 %s23, %s30
      %s37 = sor.u32 %s35, %s36
      %p38 = scmp.eq.s32.totalorder %s37, 0
      %s40 = sadd.s32 %s39, 1
      %s41 = scalar_select %p38, %s39, %s40
      %p44 = pneg %p38
      %p45 = scmp.eq.s32.totalorder %s15, 7
      %p46 = por %p44, %p45
      %p47 = scmp.ne.s32.totalorder %s39, %s42
      %p48 = scmp.eq.s32.totalorder %s15, 0
      %p49 = por %p47, %p48
      %p50 = scmp.ne.s32.totalorder %s39, %s42
      %p51 = scmp.eq.s32.totalorder %s20, 7
      %p52 = por %p50, %p51
      %p53 = scmp.ne.s32.totalorder %s42, %s43
      %p54 = scmp.eq.s32.totalorder %s20, 0
      %p55 = por %p53, %p54
      %p56 = scmp.ne.s32.totalorder %s42, %s43
      %p57 = scmp.eq.s32.totalorder %s21, 7
      %p58 = por %p56, %p57
      %p60 = scmp.ne.s32.totalorder %s43, %s59
      %p61 = scmp.eq.s32.totalorder %s21, 0
      %p62 = por %p60, %p61
      %s63 = ssub.s32 %s22, %s34
      %p64 = scmp.eq.s32.totalorder %s63, 0
      %s66 = sadd.s32 %s65, 1
      %s67 = scalar_select %p64, %s65, %s66
      %p70 = pneg %p64
      %p71 = scmp.eq.s32.totalorder %s15, 7
      %p72 = por %p70, %p71
      %p73 = scmp.ne.s32.totalorder %s65, %s68
      %p74 = scmp.eq.s32.totalorder %s15, 0
      %p75 = por %p73, %p74
      %p76 = scmp.ne.s32.totalorder %s65, %s68
      %p77 = scmp.eq.s32.totalorder %s20, 7
      %p78 = por %p76, %p77
      %p79 = scmp.ne.s32.totalorder %s68, %s69
      %p80 = scmp.eq.s32.totalorder %s20, 0
      %p81 = por %p79, %p80
      %p82 = scmp.ne.s32.totalorder %s68, %s69
      %p83 = scmp.eq.s32.totalorder %s21, 7
      %p84 = por %p82, %p83
      %p86 = scmp.ne.s32.totalorder %s69, %s85
      %p87 = scmp.eq.s32.totalorder %s21, 0
      %p88 = por %p86, %p87
      %s89 = ssub.s32 %s22, %s34
      %p90 = scmp.eq.s32.totalorder %s89, 0
      %s92 = sadd.s32 %s91, 1
      %s93 = scalar_select %p90, %s91, %s92
      %p96 = pneg %p90
      %p97 = scmp.eq.s32.totalorder %s15, 7
      %p98 = por %p96, %p97
      %p99 = scmp.ne.s32.totalorder %s91, %s94
      %p100 = scmp.eq.s32.totalorder %s15, 0
      %p101 = por %p99, %p100
      %p102 = scmp.ne.s32.totalorder %s91, %s94
      %p103 = scmp.eq.s32.totalorder %s20, 7
      %p104 = por %p102, %p103
      %p105 = scmp.ne.s32.totalorder %s94, %s95
      %p106 = scmp.eq.s32.totalorder %s20, 0
      %p107 = por %p105, %p106
      %p108 = scmp.ne.s32.totalorder %s94, %s95
      %p109 = scmp.eq.s32.totalorder %s21, 7
      %p110 = por %p108, %p109
      %p112 = scmp.ne.s32.totalorder %s95, %s111
      %p113 = scmp.eq.s32.totalorder %s21, 0
      %p114 = por %p112, %p113
      %s115 = ssub.s32 %s22, %s34
      %p116 = scmp.eq.s32.totalorder %s115, 0
      %s118 = sadd.s32 %s117, 1
      %s119 = scalar_select %p116, %s117, %s118
      %p122 = pneg %p116
      %p123 = scmp.eq.s32.totalorder %s15, 7
      %p124 = por %p122, %p123
      %p125 = scmp.ne.s32.totalorder %s117, %s120
      %p126 = scmp.eq.s32.totalorder %s15, 0
      %p127 = por %p125, %p126
      %p128 = scmp.ne.s32.totalorder %s117, %s120
      %p129 = scmp.eq.s32.totalorder %s20, 7
      %p130 = por %p128, %p129
      %p131 = scmp.ne.s32.totalorder %s120, %s121
      %p132 = scmp.eq.s32.totalorder %s20, 0
      %p133 = por %p131, %p132
      %p134 = scmp.ne.s32.totalorder %s120, %s121
      %p135 = scmp.eq.s32.totalorder %s21, 7
      %p136 = por %p134, %p135
      %p138 = scmp.ne.s32.totalorder %s121, %s137
      %p139 = scmp.eq.s32.totalorder %s21, 0
      %p140 = por %p138, %p139
      %s141 = ssub.s32 %s22, %s34
      %s142 = ssub.s32 %s23, %s30
      %s143 = sor.u32 %s141, %s142
      %p144 = scmp.eq.s32.totalorder %s143, 0
      %s146 = sadd.s32 %s145, 1
      %s147 = scalar_select %p144, %s145, %s146
      %p150 = pneg %p144
      %p151 = scmp.eq.s32.totalorder %s15, 7
      %p152 = por %p150, %p151
      %p153 = scmp.ne.s32.totalorder %s145, %s148
      %p154 = scmp.eq.s32.totalorder %s15, 0
      %p155 = por %p153, %p154
      %p156 = scmp.ne.s32.totalorder %s145, %s148
      %p157 = scmp.eq.s32.totalorder %s20, 7
      %p158 = por %p156, %p157
      %p159 = scmp.ne.s32.totalorder %s148, %s149
      %p160 = scmp.eq.s32.totalorder %s20, 0
      %p161 = por %p159, %p160
      %p162 = scmp.ne.s32.totalorder %s148, %s149
      %p163 = scmp.eq.s32.totalorder %s21, 7
      %p164 = por %p162, %p163
      %p166 = scmp.ne.s32.totalorder %s149, %s165
      %p167 = scmp.eq.s32.totalorder %s21, 0
      %p168 = por %p166, %p167
      %s169 = ssub.s32 %s22, %s34
      %p170 = scmp.eq.s32.totalorder %s169, 0
      %s172 = sadd.s32 %s171, 1
      %s173 = scalar_select %p170, %s171, %s172
      %p176 = pneg %p170
      %p177 = scmp.eq.s32.totalorder %s15, 7
      %p178 = por %p176, %p177
      %p179 = scmp.ne.s32.totalorder %s171, %s174
      %p180 = scmp.eq.s32.totalorder %s15, 0
      %p181 = por %p179, %p180
      %p182 = scmp.ne.s32.totalorder %s171, %s174
      %p183 = scmp.eq.s32.totalorder %s20, 7
      %p184 = por %p182, %p183
      %p185 = scmp.ne.s32.totalorder %s174, %s175
      %p186 = scmp.eq.s32.totalorder %s20, 0
      %p187 = por %p185, %p186
      %p188 = scmp.ne.s32.totalorder %s174, %s175
      %p189 = scmp.eq.s32.totalorder %s21, 7
      %p190 = por %p188, %p189
      %p192 = scmp.ne.s32.totalorder %s175, %s191
      %p193 = scmp.eq.s32.totalorder %s21, 0
      %p194 = por %p192, %p193
      %p195 = scmp.le.s32.totalorder 1, %s15
      %p196 = scmp.lt.s32.totalorder %s15, 9
      %p197 = pnand %p195, %p196
      %p198 = pneg %p197
      // Predicated region
      $region9: #{s2s_gru_forward.3} parent=5 // pred_check
        _
      $region10: #{s2s_gru_forward.3} parent=5 // pred_check_branch
        %200 = sbr.rel (%p197) target = $region12
      $region11: #{s2s_gru_forward.3} parent=5 // pred_region
        %s201 = ssub.s32 %s15, 1
        // Predicated region
        $region13: #{s2s_gru_forward.3} parent=11 // pred_check
          %p202 = pneg %p81
        $region14: #{s2s_gru_forward.3} parent=11 // pred_check_branch
          %204 = sbr.rel (%p202) target = $region16
        $region15: #{s2s_gru_forward.3} parent=11 // pred_region
          %p205 = scmp.lt.s32.totalorder %s24, 0
          %s206 = scalar_select %p205, %s24, 0
          %s207 = smul.addr %s206, 2
          %s208 = scalar_lea.vmem %s1, %s207
        $region16: #{s2s_gru_forward.3} parent=11 // pred_fallthru
          _
        // Predicated region
        $region17: #{s2s_gru_forward.3} parent=11 // pred_check
          %p209 = pneg %p107
        $region18: #{s2s_gru_forward.3} parent=11 // pred_check_branch
          %211 = sbr.rel (%p209) target = $region20
        $region19: #{s2s_gru_forward.3} parent=11 // pred_region
          %p212 = scmp.lt.s32.totalorder %s24, 0
          %s213 = scalar_select %p212, %s24, 0
          %s214 = smul.addr %s213, 48
          %s215 = smul.addr %s214, 4
          %s216 = scalar_lea.vmem %s2, %s215
        $region20: #{s2s_gru_forward.3} parent=11 // pred_fallthru
          _
        // Predicated region
        $region21: #{s2s_gru_forward.3} parent=11 // pred_check
          %p217 = pneg %p133
        $region22: #{s2s_gru_forward.3} parent=11 // pred_check_branch
          %219 = sbr.rel (%p217) target = $region24
        $region23: #{s2s_gru_forward.3} parent=11 // pred_region
          %p220 = scmp.lt.s32.totalorder %s24, 0
          %s221 = scalar_select %p220, %s24, 0
          %s222 = scalar_lea.vmem %s3, %s221
        $region24: #{s2s_gru_forward.3} parent=11 // pred_fallthru
          _
      $region12: #{s2s_gru_forward.3} parent=5 // pred_fallthru
        _
      %p223 = scmp.lt.s32.totalorder %s15, 8
      // Predicated region
      $region25: #{s2s_gru_forward.3} parent=5 // pred_check
        %p224 = pneg %p223
      $region26: #{s2s_gru_forward.3} parent=5 // pred_check_branch
        %226 = sbr.rel (%p224) target = $region28
      $region27: #{s2s_gru_forward.3} parent=5 // pred_region
        // Predicated region
        $region29: #{s2s_gru_forward.3} parent=27 // pred_check
          %p227 = pneg %p49
        $region30: #{s2s_gru_forward.3} parent=27 // pred_check_branch
          %229 = sbr.rel (%p227) target = $region32
        $region31: #{s2s_gru_forward.3} parent=27 // pred_region
          %p230 = scmp.lt.s32.totalorder %s22, 0
          %s231 = scalar_select %p230, %s22, 0
          %p232 = scmp.lt.s32.totalorder %s23, 7
          %s233 = scalar_select %p232, %s23, 7
          %s234 = smul.addr %s233, 3
          %s235 = smul.addr %s231, 24
          %s236 = sadd.s32 %s234, %s235
          %s237 = smul.addr %s236, 2
          %s238 = scalar_lea.vmem %s0, %s237
        $region32: #{s2s_gru_forward.3} parent=27 // pred_fallthru
          _
      $region28: #{s2s_gru_forward.3} parent=5 // pred_fallthru
        _
      %p239 = scmp.le.s32.totalorder 1, %s15
      %p240 = scmp.lt.s32.totalorder %s15, 9
      %p241 = pnand %p239, %p240
      %p242 = pneg %p241
      // Predicated region
      $region33: #{s2s_gru_forward.3} parent=5 // pred_check
        _
      $region34: #{s2s_gru_forward.3} parent=5 // pred_check_branch
        %244 = sbr.rel (%p241) target = $region36
      $region35: #{s2s_gru_forward.3} parent=5 // pred_region
        %s245 = ssub.s32 %s15, 1
        %p246 = scmp.lt.s32.totalorder %s24, 0
        %s247 = scalar_select %p246, %s24, 0
        %p248 = scmp.lt.s32.totalorder %s25, 7
        %s249 = scalar_select %p248, %s25, 7
        %s250 = smul.addr %s249, 3
        %s251 = smul.addr %s247, 24
        %s252 = sadd.s32 %s250, %s251
        %s253 = smul.addr %s252, 2
        %s254 = scalar_lea.vmem %s0, %s253
        %p255 = pneg %p55
        %p256 = pneg %p52
        %p257 = scmp.lt.s32.totalorder %s24, 0
        %s258 = scalar_select %p257, %s24, 0
        %s259 = smul.addr %s258, 2
        %s260 = scalar_lea.vmem %s1, %s259
        %p261 = pneg %p81
        %p262 = pneg %p78
        %p263 = scmp.lt.s32.totalorder %s24, 0
        %s264 = scalar_select %p263, %s24, 0
        %s265 = smul.addr %s264, 48
        %s266 = smul.addr %s265, 4
        %s267 = scalar_lea.vmem %s2, %s266
        %p268 = pneg %p107
        %p269 = pneg %p104
        %p270 = scmp.lt.s32.totalorder %s24, 0
        %s271 = scalar_select %p270, %s24, 0
        %s272 = scalar_lea.vmem %s3, %s271
        %p273 = pneg %p133
        %p274 = pneg %p130
        %p275 = pneg %p161
        %p276 = pneg %p158
        %s277 = sand.u32 %s148, 1
        %s278 = scalar_lea.sflag [#allocation3], %s277
        %s279 = sand.u32 %s148, 1
        %s280 = smul.addr %s279, 2
        %s281 = scalar_lea.vmem [#allocation2], %s280
        %p282 = pneg %p187
        %p283 = pneg %p184
        %p284 = scmp.lt.s32.totalorder %s24, 0
        %s285 = scalar_select %p284, %s24, 0
        %s286 = smul.addr %s285, 2
        %s287 = scalar_lea.vmem %s5, %s286
        %p288 = scmp.lt.s32.totalorder %s24, 0
        %s289 = scalar_select %p288, %s24, 0
        %p290 = scmp.lt.s32.totalorder %s25, 7
        %s291 = scalar_select %p290, %s25, 7
        %s292 = smul.addr %s291, 3
        %s293 = smul.addr %s289, 24
        %s294 = sadd.s32 %s292, %s293
        %s295 = smul.addr %s294, 2
        %s296 = scalar_lea.vmem %s0, %s295
        %p297 = scmp.lt.s32.totalorder %s24, 0
        %s298 = scalar_select %p297, %s24, 0
        %s299 = smul.addr %s298, 2
        %s300 = scalar_lea.vmem %s1, %s299
        %p301 = scmp.lt.s32.totalorder %s24, 0
        %s302 = scalar_select %p301, %s24, 0
        %s303 = smul.addr %s302, 48
        %s304 = smul.addr %s303, 4
        %s305 = scalar_lea.vmem %s2, %s304
        %p306 = scmp.lt.s32.totalorder %s24, 0
        %s307 = scalar_select %p306, %s24, 0
        %s308 = scalar_lea.vmem %s3, %s307
        %p309 = scmp.lt.s32.totalorder %s24, 0
        %s310 = scalar_select %p309, %s24, 0
        %s311 = smul.addr %s310, 2
        %s312 = scalar_lea.vmem %s5, %s311
        %p313 = scmp.eq.s32.totalorder %s25, 0
        // Predicated region
        $region37: #{s2s_gru_forward.3} parent=35 // pred_check
          %p314 = pneg %p313
        $region38: #{s2s_gru_forward.3} parent=35 // pred_check_branch
          %316 = sbr.rel (%p314) target = $region40
        $region39: #{s2s_gru_forward.3} parent=35 // pred_region
          %v317 = vld [vmem:[%s300] sm:$0x3]
          %318 = vst [vmem:[%s312] sm:$0x3] %v317
        $region40: #{s2s_gru_forward.3} parent=35 // pred_fallthru
          _
        %v319 = vld [vmem:[%s312] sm:$0x3]
        %v320 = vld [vmem:[%s296] sm:$0x3f]
        %v321 = vpack.c.bf16 %v319, %v319
        %v322 = vld [vmem:[%s305] sm:$0xff]
        %v323 = vld [vmem:[%s305 + $0x8] sm:$0xf]
        %v324 = vld [vmem:[%s305 + $0xc] sm:$0xff]
        %v325 = vld [vmem:[%s305 + $0x14] sm:$0xf]
        %v326 = vld [vmem:[%s305 + $0x18] sm:$0xff]
        %v327 = vld [vmem:[%s305 + $0x20] sm:$0xf]
        %v328 = vld [vmem:[%s305 + $0x24] sm:$0xff]
        %v329 = vld [vmem:[%s305 + $0x2c] sm:$0xf]
        %v330 = vld [vmem:[%s305 + $0x30] sm:$0xff]
        %v331 = vld [vmem:[%s305 + $0x38] sm:$0xf]
        %v332 = vld [vmem:[%s305 + $0x3c] sm:$0xff]
        %v333 = vld [vmem:[%s305 + $0x44] sm:$0xf]
        %v334 = vld [vmem:[%s305 + $0x48] sm:$0xff]
        %v335 = vld [vmem:[%s305 + $0x50] sm:$0xf]
        %v336 = vld [vmem:[%s305 + $0x54] sm:$0xff]
        %v337 = vld [vmem:[%s305 + $0x5c] sm:$0xf]
        %v338 = vld [vmem:[%s305 + $0x60] sm:$0xff]
        %v339 = vld [vmem:[%s305 + $0x68] sm:$0xf]
        %v340 = vld [vmem:[%s305 + $0x6c] sm:$0xff]
        %v341 = vld [vmem:[%s305 + $0x74] sm:$0xf]
        %v342 = vld [vmem:[%s305 + $0x78] sm:$0xff]
        %v343 = vld [vmem:[%s305 + $0x80] sm:$0xf]
        %v344 = vld [vmem:[%s305 + $0x84] sm:$0xff]
        %v345 = vld [vmem:[%s305 + $0x8c] sm:$0xf]
        %v346 = vld [vmem:[%s305 + $0x90] sm:$0xff]
        %v347 = vld [vmem:[%s305 + $0x98] sm:$0xf]
        %v348 = vld [vmem:[%s305 + $0x9c] sm:$0xff]
        %v349 = vld [vmem:[%s305 + $0xa4] sm:$0xf]
        %v350 = vld [vmem:[%s305 + $0xa8] sm:$0xff]
        %v351 = vld [vmem:[%s305 + $0xb0] sm:$0xf]
        %v352 = vld [vmem:[%s305 + $0xb4] sm:$0xff]
        %v353 = vld [vmem:[%s305 + $0xbc] sm:$0xf]
        %v386 = vunpack.c.l.b16 %v322
        %v387 = vunpack.c.h.b16 %v322
        %v388 = vunpack.c.l.b16 %v323
        %v389 = vunpack.c.l.b16 %v324
        %v390 = vunpack.c.h.b16 %v324
        %v391 = vunpack.c.l.b16 %v325
        %v392 = vunpack.c.l.b16 %v326
        %v393 = vunpack.c.h.b16 %v326
        %v394 = vunpack.c.l.b16 %v327
        %v395 = vunpack.c.l.b16 %v328
        %v396 = vunpack.c.h.b16 %v328
        %v397 = vunpack.c.l.b16 %v329
        %v398 = vunpack.c.l.b16 %v330
        %v399 = vunpack.c.h.b16 %v330
        %v400 = vunpack.c.l.b16 %v331
        %v401 = vunpack.c.l.b16 %v332
        %v402 = vunpack.c.h.b16 %v332
        %v403 = vunpack.c.l.b16 %v333
        %v404 = vunpack.c.l.b16 %v334
        %v405 = vunpack.c.h.b16 %v334
        %v406 = vunpack.c.l.b16 %v335
        %v407 = vunpack.c.l.b16 %v336
        %v408 = vunpack.c.h.b16 %v336
        %v409 = vunpack.c.l.b16 %v337
        %v410 = vunpack.c.l.b16 %v338
        %v411 = vunpack.c.h.b16 %v338
        %v412 = vunpack.c.l.b16 %v339
        %v413 = vunpack.c.l.b16 %v340
        %v414 = vunpack.c.h.b16 %v340
        %v415 = vunpack.c.l.b16 %v341
        %v416 = vunpack.c.l.b16 %v342
        %v417 = vunpack.c.h.b16 %v342
        %v418 = vunpack.c.l.b16 %v343
        %v419 = vunpack.c.l.b16 %v344
        %v420 = vunpack.c.h.b16 %v344
        %v421 = vunpack.c.l.b16 %v345
        %v422 = vunpack.c.l.b16 %v346
        %v423 = vunpack.c.h.b16 %v346
        %v424 = vunpack.c.l.b16 %v347
        %v425 = vunpack.c.l.b16 %v348
        %v426 = vunpack.c.h.b16 %v348
        %v427 = vunpack.c.l.b16 %v349
        %v428 = vunpack.c.l.b16 %v350
        %v429 = vunpack.c.h.b16 %v350
        %v430 = vunpack.c.l.b16 %v351
        %v431 = vunpack.c.l.b16 %v352
        %v432 = vunpack.c.h.b16 %v352
        %v433 = vunpack.c.l.b16 %v353
        %v434 = vpack.c.b16 %v389, %v386
        %v435 = vpack.c.b16 %v390, %v387
        %v436 = vpack.c.b16 %v391, %v388
        %v437 = vpack.c.b16 %v395, %v392
        %v438 = vpack.c.b16 %v396, %v393
        %v439 = vpack.c.b16 %v397, %v394
        %v440 = vpack.c.b16 %v401, %v398
        %v441 = vpack.c.b16 %v402, %v399
        %v442 = vpack.c.b16 %v403, %v400
        %v443 = vpack.c.b16 %v407, %v404
        %v444 = vpack.c.b16 %v408, %v405
        %v445 = vpack.c.b16 %v409, %v406
        %v446 = vpack.c.b16 %v413, %v410
        %v447 = vpack.c.b16 %v414, %v411
        %v448 = vpack.c.b16 %v415, %v412
        %v449 = vpack.c.b16 %v419, %v416
        %v450 = vpack.c.b16 %v420, %v417
        %v451 = vpack.c.b16 %v421, %v418
        %v452 = vpack.c.b16 %v425, %v422
        %v453 = vpack.c.b16 %v426, %v423
        %v454 = vpack.c.b16 %v427, %v424
        %v455 = vpack.c.b16 %v431, %v428
        %v456 = vpack.c.b16 %v432, %v429
        %v457 = vpack.c.b16 %v433, %v430
        %482 = vmatpush.bf16.msra.mxu0 %v455
        %483 = vmatpush.bf16.msra.mxu0 %v452
        %484 = vmatpush.bf16.msra.mxu0 %v449
        %485 = vmatpush.bf16.msra.mxu0 %v446
        %486 = vmatpush.bf16.msra.mxu0 %v443
        %487 = vmatpush.bf16.msra.mxu0 %v440
        %488 = vmatpush.bf16.msra.mxu0 %v437
        %489 = vmatpush.bf16.msra.mxu0 %v434
        %490 = vmatmul.bf16.gmra.mxu0 %v321
        %v491 = vpop.f32.mrf.mxu0
        %v492 = vadd.f32 0.0, %v491
        %v493 = vpop.f32.mrf.mxu0
        %494 = vdwg.mxu0
        %495 = vmatpush.bf16.msra.mxu0 %v456
        %496 = vmatpush.bf16.msra.mxu0 %v453
        %497 = vmatpush.bf16.msra.mxu0 %v450
        %498 = vmatpush.bf16.msra.mxu0 %v447
        %499 = vmatpush.bf16.msra.mxu0 %v444
        %500 = vmatpush.bf16.msra.mxu0 %v441
        %501 = vmatpush.bf16.msra.mxu0 %v438
        %502 = vmatpush.bf16.msra.mxu0 %v435
        %503 = vmatmul.bf16.gmra.mxu0 %v321
        %v504 = vpop.f32.mrf.mxu0
        %v505 = vadd.f32 0.0, %v504
        %v506 = vpop.f32.mrf.mxu0
        %507 = vdwg.mxu0
        %508 = vmatpush.bf16.msra.mxu0 %v457
        %509 = vmatpush.bf16.msra.mxu0 %v454
        %510 = vmatpush.bf16.msra.mxu0 %v451
        %511 = vmatpush.bf16.msra.mxu0 %v448
        %512 = vmatpush.bf16.msra.mxu0 %v445
        %513 = vmatpush.bf16.msra.mxu0 %v442
        %514 = vmatpush.bf16.msra.mxu0 %v439
        %515 = vmatpush.bf16.msra.mxu0 %v436
        %516 = vmatmul.bf16.gmra.mxu0 %v321
        %v517 = vpop.f32.mrf.mxu0
        %v518 = vadd.f32 0.0, %v517
        %v519 = vpop.f32.mrf.mxu0
        %520 = vdwg.mxu0
        %v521 = vadd.f32 %v320, %v492
        %v522 = vxor.u32 %v521, 2147483648
        %v523 = vmul.f32 %v522, 1.442695
        %v524 = vpow.pop %v523
        %v525 = vadd.f32 %v524, 1.0
        %v526 = vrcp.pop %v525
        %v527 = vmul.f32 %v525, %v526
        %v528 = vsub.f32 1.0, %v527
        %v529 = vmul.f32 %v526, %v528
        %v530 = vadd.f32 %v526, %v529
        %vm531 = vweird.f32 %v525
        %vm532 = vweird.f32 %v526
        %vm533 = vmor %vm531, %vm532
        %v534 = vsel %vm533, %v526, %v530
        %v535 = vand.u32 2147483647, %v525
        %vm536 = vcmp.eq.f32.partialorder %v535, 8.507059e+37
        %v537 = vand.u32 %v525, 2147483648
        %v538 = vor.u32 1.1754944e-38, %v537
        %v539 = vsel %vm536, %v538, %v534
        %v540 = vmul.f32 1.0, %v539
        %v542 = vrot.slane %v320, 2
        %v544 = vadd.f32 %v542, %v505
        %v545 = vxor.u32 %v544, 2147483648
        %v546 = vmul.f32 %v545, 1.442695
        %v547 = vpow.pop %v546
        %v548 = vadd.f32 %v547, 1.0
        %v549 = vrcp.pop %v548
        %v550 = vmul.f32 %v548, %v549
        %v551 = vsub.f32 1.0, %v550
        %v552 = vmul.f32 %v549, %v551
        %v553 = vadd.f32 %v549, %v552
        %vm554 = vweird.f32 %v548
        %vm555 = vweird.f32 %v549
        %vm556 = vmor %vm554, %vm555
        %v557 = vsel %vm556, %v549, %v553
        %v558 = vand.u32 2147483647, %v548
        %vm559 = vcmp.eq.f32.partialorder %v558, 8.507059e+37
        %v560 = vand.u32 %v548, 2147483648
        %v561 = vor.u32 1.1754944e-38, %v560
        %v562 = vsel %vm559, %v561, %v557
        %v563 = vmul.f32 1.0, %v562
        %v564 = vld [vmem:[%s308] sm:$0x1]
        %v566 = vperm.slane %v564, 0
        %v568 = vadd.f32 %v518, %v566
        %v569 = vmul.f32 %v540, %v568
        %v570 = vrot.slane %v320, 4
        %v572 = vadd.f32 %v570, %v569
        %v573 = vtanh.pop %v572
        %v574 = vsub.f32 1.0, %v563
        %v575 = vmul.f32 %v574, %v573
        %v576 = vmul.f32 %v563, %v319
        %v577 = vadd.f32 %v575, %v576
        %578 = vst [vmem:[%s312] sm:$0x3] %v577
        %579 = vst [vmem:[%s281] sm:$0x3] %v577
        %s580 = sand.u32 %s148, 1
        %s581 = scalar_lea.sflag [#allocation3], %s580
        %s582 = sand.u32 %s148, 1
        %s583 = smul.addr %s582, 2
        %s584 = scalar_lea.vmem [#allocation2], %s583
        %p585 = scmp.lt.s32.totalorder %s24, 0
        %s586 = scalar_select %p585, %s24, 0
        %s587 = smul.addr %s586, 2
        %s588 = scalar_lea.vmem %s5, %s587
        // Predicated region
        $region41: #{s2s_gru_forward.3} parent=35 // pred_check
          %p589 = pneg %p158
        $region42: #{s2s_gru_forward.3} parent=35 // pred_check_branch
          %591 = sbr.rel (%p589) target = $region44
        $region43: #{s2s_gru_forward.3} parent=35 // pred_region
          %593 = vsyncadd %s581, 0
          %s594 = smul.addr %s24, 8
          %s595 = sadd.s32 %s25, %s594
          %s596 = smul.addr %s595, 2
          %s597 = scalar_lea.hbm %s4, %s596
          %s599 = sshll.u32 %s584, 4
          %s600 = int_to_ptr.vmem [resolvable:$true] %s599
          %s601 = sshll.u32 %s597, 4
          %s602 = int_to_ptr.hbm [resolvable:$true] %s601
          %604 = dma.vmem_to_hbm [thread:$0]  %s600, 32, %s602, %s581
        $region44: #{s2s_gru_forward.3} parent=35 // pred_fallthru
          _
        // Predicated region
        $region45: #{s2s_gru_forward.3} parent=35 // pred_check
          %p605 = pneg %p184
        $region46: #{s2s_gru_forward.3} parent=35 // pred_check_branch
          %607 = sbr.rel (%p605) target = $region48
        $region47: #{s2s_gru_forward.3} parent=35 // pred_region
          _
        $region48: #{s2s_gru_forward.3} parent=35 // pred_fallthru
          _
        // Predicated region
        $region49: #{s2s_gru_forward.3} parent=35 // pred_check
          %p608 = pneg %p184
        $region50: #{s2s_gru_forward.3} parent=35 // pred_check_branch
          %610 = sbr.rel (%p608) target = $region52
        $region51: #{s2s_gru_forward.3} parent=35 // pred_region
          %p611 = scmp.lt.s32.totalorder %s24, 0
          %s612 = scalar_select %p611, %s24, 0
          %s613 = smul.addr %s612, 2
          %s614 = scalar_lea.vmem %s5, %s613
        $region52: #{s2s_gru_forward.3} parent=35 // pred_fallthru
          _
      $region36: #{s2s_gru_forward.3} parent=5 // pred_fallthru
        _
      %p615 = scmp.le.s32.totalorder 2, %s15
      // Predicated region
      $region53: #{s2s_gru_forward.3} parent=5 // pred_check
        %p616 = pneg %p615
      $region54: #{s2s_gru_forward.3} parent=5 // pred_check_branch
        %618 = sbr.rel (%p616) target = $region56
      $region55: #{s2s_gru_forward.3} parent=5 // pred_region
        %s619 = ssub.s32 %s15, 2
        // Predicated region
        $region57: #{s2s_gru_forward.3} parent=55 // pred_check
          %p620 = pneg %p164
        $region58: #{s2s_gru_forward.3} parent=55 // pred_check_branch
          %622 = sbr.rel (%p620) target = $region60
        $region59: #{s2s_gru_forward.3} parent=55 // pred_region
          %s623 = sand.u32 %s149, 1
          %s624 = scalar_lea.sflag [#allocation3], %s623
          %s625 = sand.u32 %s149, 1
          %s626 = smul.addr %s625, 2
          %s627 = scalar_lea.vmem [#allocation2], %s626
          %629 = dma.done %s624, 32
        $region60: #{s2s_gru_forward.3} parent=55 // pred_fallthru
          _
      $region56: #{s2s_gru_forward.3} parent=5 // pred_fallthru
        _
    $region6: #{s2s_gru_forward.3} parent=1 // loop_footer
      %s19 = sadd.s32 1, %s15
    $region7: #{s2s_gru_forward.3} parent=1 // loop_footer_branch
      %14 = sbr.rel target = $region3
    $region8: #{s2s_gru_forward.3} parent=1 // loop_exit
      _
    %630 = vsyncpa [#allocation3], 1
    %s631 = scalar_lea.sflag [#allocation3], 1
    %632 = vsyncpa %s631, 1

// kernel: s2s_gru_forward.5
$region0: #{s2s_gru_forward.5}
  #allocation0 [shape = 'u32[]', space=smem, size = 0x4, offset = 0x4, fixed_abs, tag = 'smem constant byte address 0x4 - core index']
  #allocation1 [shape = 'u32[72,128]{1,0:T(1,128)}', space=vmem, size = 0x9000, scoped, tag = 'internal scratch']
  #allocation2 [shape = 'bf16[16,128]{1,0:T(8,128)(2,1)}', space=vmem, size = 0x1000, scoped, tag = 'scratch operand']
  %s0 = inlined_call_operand.vmem [shape: bf16[2,16,128], index: 0, kind: input, shape index: {}]
  %s1 = inlined_call_operand.vmem [shape: bf16[2,128,128], index: 1, kind: input, shape index: {}]
  %s2 = inlined_call_operand.vmem [shape: f32[2,1,128], index: 2, kind: input, shape index: {}]
  %s3 = inlined_call_operand.vmem [shape: bf16[128,512], index: 3, kind: input, shape index: {}]
  %s4 = inlined_call_operand.vmem [shape: f32[1,512], index: 4, kind: input, shape index: {}]
  %s5 = inlined_call_operand.vmem [shape: f32[2,16,512], index: 5, kind: output, shape index: {}]
  %s6 = sld [smem:[#allocation0]]
  $region57: #{s2s_gru_forward.5} parent=0
    _
  %s8 = ssub.s32 1, %s6
  %s9 = scalar_select 0, %s8, %s6
  loop: start=0, step=1, limit=4
  $region2: #{s2s_gru_forward.5} parent=0 // loop_pre_header
    _
  $region3: #{s2s_gru_forward.5} parent=0 // loop_header
    %s11 = sphi 0, %s15
    %p12 = scmp.ge.s32.totalorder %s11, 4
    %s18 = sphi 0, %s30
    %s19 = sphi 0, %s26
    %s20 = sphi 0, %s18
    %s21 = sphi 0, %s19
    %s22 = sphi 0, %s20
    %s23 = sphi 0, %s21
    %s33 = sphi 0, %s35
    %s36 = sphi 0, %s33
    %s37 = sphi 0, %s36
    %s53 = sphi 0, %s37
    %s59 = sphi 0, %s61
    %s62 = sphi 0, %s59
    %s63 = sphi 0, %s62
    %s79 = sphi 0, %s63
    %s85 = sphi 0, %s87
    %s88 = sphi 0, %s85
    %s89 = sphi 0, %s88
    %s105 = sphi 0, %s89
    %s111 = sphi 0, %s113
    %s114 = sphi 0, %s111
    %s115 = sphi 0, %s114
    %s131 = sphi 0, %s115
    %s137 = sphi 0, %s139
    %s140 = sphi 0, %s137
    %s141 = sphi 0, %s140
    %s157 = sphi 0, %s141
    %s165 = sphi 0, %s167
    %s168 = sphi 0, %s165
    %s169 = sphi 0, %s168
    %s185 = sphi 0, %s169
  $region4: #{s2s_gru_forward.5} parent=0 // loop_header_branch
    %14 = sbr.rel (%p12) target = $region8
  $region5: #{s2s_gru_forward.5} parent=0 // loop_body
    %s16 = ssub.s32 %s11, 1
    %s17 = ssub.s32 %s11, 2
    %s24 = sadd.s32 1, %s19
    %p25 = scmp.ge.s32.totalorder %s24, 1
    %s26 = scalar_select %p25, 0, %s24
    %s27 = sadd.s32 1, %s18
    %s28 = scalar_select %p25, %s27, %s18
    %p29 = scmp.ge.s32.totalorder %s28, 2
    %s30 = scalar_select %p29, 0, %s28
    %s31 = ssub.s32 %s18, %s30
    %p32 = scmp.eq.s32.totalorder %s31, 0
    %s34 = sadd.s32 %s33, 1
    %s35 = scalar_select %p32, %s33, %s34
    %p38 = pneg %p32
    %p39 = scmp.eq.s32.totalorder %s11, 1
    %p40 = por %p38, %p39
    %p41 = scmp.ne.s32.totalorder %s33, %s36
    %p42 = scmp.eq.s32.totalorder %s11, 0
    %p43 = por %p41, %p42
    %p44 = scmp.ne.s32.totalorder %s33, %s36
    %p45 = scmp.eq.s32.totalorder %s16, 1
    %p46 = por %p44, %p45
    %p47 = scmp.ne.s32.totalorder %s36, %s37
    %p48 = scmp.eq.s32.totalorder %s16, 0
    %p49 = por %p47, %p48
    %p50 = scmp.ne.s32.totalorder %s36, %s37
    %p51 = scmp.eq.s32.totalorder %s17, 1
    %p52 = por %p50, %p51
    %p54 = scmp.ne.s32.totalorder %s37, %s53
    %p55 = scmp.eq.s32.totalorder %s17, 0
    %p56 = por %p54, %p55
    %s57 = ssub.s32 %s18, %s30
    %p58 = scmp.eq.s32.totalorder %s57, 0
    %s60 = sadd.s32 %s59, 1
    %s61 = scalar_select %p58, %s59, %s60
    %p64 = pneg %p58
    %p65 = scmp.eq.s32.totalorder %s11, 1
    %p66 = por %p64, %p65
    %p67 = scmp.ne.s32.totalorder %s59, %s62
    %p68 = scmp.eq.s32.totalorder %s11, 0
    %p69 = por %p67, %p68
    %p70 = scmp.ne.s32.totalorder %s59, %s62
    %p71 = scmp.eq.s32.totalorder %s16, 1
    %p72 = por %p70, %p71
    %p73 = scmp.ne.s32.totalorder %s62, %s63
    %p74 = scmp.eq.s32.totalorder %s16, 0
    %p75 = por %p73, %p74
    %p76 = scmp.ne.s32.totalorder %s62, %s63
    %p77 = scmp.eq.s32.totalorder %s17, 1
    %p78 = por %p76, %p77
    %p80 = scmp.ne.s32.totalorder %s63, %s79
    %p81 = scmp.eq.s32.totalorder %s17, 0
    %p82 = por %p80, %p81
    %s83 = ssub.s32 %s18, %s30
    %p84 = scmp.eq.s32.totalorder %s83, 0
    %s86 = sadd.s32 %s85, 1
    %s87 = scalar_select %p84, %s85, %s86
    %p90 = pneg %p84
    %p91 = scmp.eq.s32.totalorder %s11, 1
    %p92 = por %p90, %p91
    %p93 = scmp.ne.s32.totalorder %s85, %s88
    %p94 = scmp.eq.s32.totalorder %s11, 0
    %p95 = por %p93, %p94
    %p96 = scmp.ne.s32.totalorder %s85, %s88
    %p97 = scmp.eq.s32.totalorder %s16, 1
    %p98 = por %p96, %p97
    %p99 = scmp.ne.s32.totalorder %s88, %s89
    %p100 = scmp.eq.s32.totalorder %s16, 0
    %p101 = por %p99, %p100
    %p102 = scmp.ne.s32.totalorder %s88, %s89
    %p103 = scmp.eq.s32.totalorder %s17, 1
    %p104 = por %p102, %p103
    %p106 = scmp.ne.s32.totalorder %s89, %s105
    %p107 = scmp.eq.s32.totalorder %s17, 0
    %p108 = por %p106, %p107
    %s109 = ssub.s32 %s19, %s26
    %p110 = scmp.eq.s32.totalorder %s109, 0
    %s112 = sadd.s32 %s111, 1
    %s113 = scalar_select %p110, %s111, %s112
    %p116 = pneg %p110
    %p117 = scmp.eq.s32.totalorder %s11, 1
    %p118 = por %p116, %p117
    %p119 = scmp.ne.s32.totalorder %s111, %s114
    %p120 = scmp.eq.s32.totalorder %s11, 0
    %p121 = por %p119, %p120
    %p122 = scmp.ne.s32.totalorder %s111, %s114
    %p123 = scmp.eq.s32.totalorder %s16, 1
    %p124 = por %p122, %p123
    %p125 = scmp.ne.s32.totalorder %s114, %s115
    %p126 = scmp.eq.s32.totalorder %s16, 0
    %p127 = por %p125, %p126
    %p128 = scmp.ne.s32.totalorder %s114, %s115
    %p129 = scmp.eq.s32.totalorder %s17, 1
    %p130 = por %p128, %p129
    %p132 = scmp.ne.s32.totalorder %s115, %s131
    %p133 = scmp.eq.s32.totalorder %s17, 0
    %p134 = por %p132, %p133
    %s135 = ssub.s32 %s19, %s26
    %p136 = scmp.eq.s32.totalorder %s135, 0
    %s138 = sadd.s32 %s137, 1
    %s139 = scalar_select %p136, %s137, %s138
    %p142 = pneg %p136
    %p143 = scmp.eq.s32.totalorder %s11, 1
    %p144 = por %p142, %p143
    %p145 = scmp.ne.s32.totalorder %s137, %s140
    %p146 = scmp.eq.s32.totalorder %s11, 0
    %p147 = por %p145, %p146
    %p148 = scmp.ne.s32.totalorder %s137, %s140
    %p149 = scmp.eq.s32.totalorder %s16, 1
    %p150 = por %p148, %p149
    %p151 = scmp.ne.s32.totalorder %s140, %s141
    %p152 = scmp.eq.s32.totalorder %s16, 0
    %p153 = por %p151, %p152
    %p154 = scmp.ne.s32.totalorder %s140, %s141
    %p155 = scmp.eq.s32.totalorder %s17, 1
    %p156 = por %p154, %p155
    %p158 = scmp.ne.s32.totalorder %s141, %s157
    %p159 = scmp.eq.s32.totalorder %s17, 0
    %p160 = por %p158, %p159
    %s161 = ssub.s32 %s18, %s30
    %s162 = ssub.s32 %s19, %s26
    %s163 = sor.u32 %s161, %s162
    %p164 = scmp.eq.s32.totalorder %s163, 0
    %s166 = sadd.s32 %s165, 1
    %s167 = scalar_select %p164, %s165, %s166
    %p170 = pneg %p164
    %p171 = scmp.eq.s32.totalorder %s11, 1
    %p172 = por %p170, %p171
    %p173 = scmp.ne.s32.totalorder %s165, %s168
    %p174 = scmp.eq.s32.totalorder %s11, 0
    %p175 = por %p173, %p174
    %p176 = scmp.ne.s32.totalorder %s165, %s168
    %p177 = scmp.eq.s32.totalorder %s16, 1
    %p178 = por %p176, %p177
    %p179 = scmp.ne.s32.totalorder %s168, %s169
    %p180 = scmp.eq.s32.totalorder %s16, 0
    %p181 = por %p179, %p180
    %p182 = scmp.ne.s32.totalorder %s168, %s169
    %p183 = scmp.eq.s32.totalorder %s17, 1
    %p184 = por %p182, %p183
    %p186 = scmp.ne.s32.totalorder %s169, %s185
    %p187 = scmp.eq.s32.totalorder %s17, 0
    %p188 = por %p186, %p187
    %p189 = scmp.le.s32.totalorder 1, %s11
    %p190 = scmp.lt.s32.totalorder %s11, 3
    %p191 = pnand %p189, %p190
    %p192 = pneg %p191
    // Predicated region
    $region9: #{s2s_gru_forward.5} parent=5 // pred_check
      _
    $region10: #{s2s_gru_forward.5} parent=5 // pred_check_branch
      %194 = sbr.rel (%p191) target = $region12
    $region11: #{s2s_gru_forward.5} parent=5 // pred_region
      %s195 = ssub.s32 %s11, 1
      // Predicated region
      $region13: #{s2s_gru_forward.5} parent=11 // pred_check
        %p196 = pneg %p127
      $region14: #{s2s_gru_forward.5} parent=11 // pred_check_branch
        %198 = sbr.rel (%p196) target = $region16
      $region15: #{s2s_gru_forward.5} parent=11 // pred_region
        %s199 = smul.u32 4, %s21
        %p200 = scmp.lt.s32.totalorder %s199, 3
        %s201 = scalar_select %p200, %s199, 3
        %s202 = smul.addr %s201, 4
        %s203 = scalar_lea.vmem %s3, %s202
        %s204 = smul.u32 4, %s21
      $region16: #{s2s_gru_forward.5} parent=11 // pred_fallthru
        _
      // Predicated region
      $region17: #{s2s_gru_forward.5} parent=11 // pred_check
        %p205 = pneg %p153
      $region18: #{s2s_gru_forward.5} parent=11 // pred_check_branch
        %207 = sbr.rel (%p205) target = $region20
      $region19: #{s2s_gru_forward.5} parent=11 // pred_region
        %s208 = smul.u32 4, %s21
        %p209 = scmp.lt.s32.totalorder %s208, 3
        %s210 = scalar_select %p209, %s208, 3
        %s211 = scalar_lea.vmem %s4, %s210
        %s212 = smul.u32 4, %s21
      $region20: #{s2s_gru_forward.5} parent=11 // pred_fallthru
        _
    $region12: #{s2s_gru_forward.5} parent=5 // pred_fallthru
      _
    %p213 = scmp.lt.s32.totalorder %s11, 2
    // Predicated region
    $region21: #{s2s_gru_forward.5} parent=5 // pred_check
      %p214 = pneg %p213
    $region22: #{s2s_gru_forward.5} parent=5 // pred_check_branch
      %216 = sbr.rel (%p214) target = $region24
    $region23: #{s2s_gru_forward.5} parent=5 // pred_region
      // Predicated region
      $region25: #{s2s_gru_forward.5} parent=23 // pred_check
        %p217 = pneg %p43
      $region26: #{s2s_gru_forward.5} parent=23 // pred_check_branch
        %219 = sbr.rel (%p217) target = $region28
      $region27: #{s2s_gru_forward.5} parent=23 // pred_region
        %p220 = scmp.lt.s32.totalorder %s18, 1
        %s221 = scalar_select %p220, %s18, 1
        %s222 = smul.addr %s221, 2
        %s223 = smul.addr %s222, 4
        %s224 = scalar_lea.vmem %s0, %s223
      $region28: #{s2s_gru_forward.5} parent=23 // pred_fallthru
        _
      // Predicated region
      $region29: #{s2s_gru_forward.5} parent=23 // pred_check
        %p225 = pneg %p69
      $region30: #{s2s_gru_forward.5} parent=23 // pred_check_branch
        %227 = sbr.rel (%p225) target = $region32
      $region31: #{s2s_gru_forward.5} parent=23 // pred_region
        %p228 = scmp.lt.s32.totalorder %s18, 1
        %s229 = scalar_select %p228, %s18, 1
        %s230 = smul.addr %s229, 16
        %s231 = smul.addr %s230, 4
        %s232 = scalar_lea.vmem %s1, %s231
      $region32: #{s2s_gru_forward.5} parent=23 // pred_fallthru
        _
      // Predicated region
      $region33: #{s2s_gru_forward.5} parent=23 // pred_check
        %p233 = pneg %p95
      $region34: #{s2s_gru_forward.5} parent=23 // pred_check_branch
        %235 = sbr.rel (%p233) target = $region36
      $region35: #{s2s_gru_forward.5} parent=23 // pred_region
        %p236 = scmp.lt.s32.totalorder %s18, 1
        %s237 = scalar_select %p236, %s18, 1
        %s238 = scalar_lea.vmem %s2, %s237
      $region36: #{s2s_gru_forward.5} parent=23 // pred_fallthru
        _
    $region24: #{s2s_gru_forward.5} parent=5 // pred_fallthru
      _
    %p239 = scmp.le.s32.totalorder 1, %s11
    %p240 = scmp.lt.s32.totalorder %s11, 3
    %p241 = pnand %p239, %p240
    %p242 = pneg %p241
    // Predicated region
    $region37: #{s2s_gru_forward.5} parent=5 // pred_check
      _
    $region38: #{s2s_gru_forward.5} parent=5 // pred_check_branch
      %244 = sbr.rel (%p241) target = $region40
    $region39: #{s2s_gru_forward.5} parent=5 // pred_region
      %s245 = ssub.s32 %s11, 1
      %p246 = scmp.lt.s32.totalorder %s20, 1
      %s247 = scalar_select %p246, %s20, 1
      %s248 = smul.addr %s247, 2
      %s249 = smul.addr %s248, 4
      %s250 = scalar_lea.vmem %s0, %s249
      %p251 = pneg %p49
      %p252 = pneg %p46
      %p253 = scmp.lt.s32.totalorder %s20, 1
      %s254 = scalar_select %p253, %s20, 1
      %s255 = smul.addr %s254, 16
      %s256 = smul.addr %s255, 4
      %s257 = scalar_lea.vmem %s1, %s256
      %p258 = pneg %p75
      %p259 = pneg %p72
      %p260 = scmp.lt.s32.totalorder %s20, 1
      %s261 = scalar_select %p260, %s20, 1
      %s262 = scalar_lea.vmem %s2, %s261
      %p263 = pneg %p101
      %p264 = pneg %p98
      %s265 = smul.u32 4, %s21
      %p266 = scmp.lt.s32.totalorder %s265, 3
      %s267 = scalar_select %p266, %s265, 3
      %s268 = smul.addr %s267, 4
      %s269 = scalar_lea.vmem %s3, %s268
      %p270 = pneg %p127
      %p271 = pneg %p124
      %s272 = smul.u32 4, %s21
      %p273 = scmp.lt.s32.totalorder %s272, 3
      %s274 = scalar_select %p273, %s272, 3
      %s275 = scalar_lea.vmem %s4, %s274
      %p276 = pneg %p153
      %p277 = pneg %p150
      %p278 = pneg %p181
      %p279 = pneg %p178
      %s280 = smul.u32 4, %s21
      %p281 = scmp.lt.s32.totalorder %s20, 1
      %s282 = scalar_select %p281, %s20, 1
      %p283 = scmp.lt.s32.totalorder %s280, 3
      %s284 = scalar_select %p283, %s280, 3
      %s285 = smul.addr %s282, 8
      %s286 = sadd.s32 %s284, %s285
      %s287 = smul.addr %s286, 8
      %s288 = scalar_lea.vmem %s5, %s287
      %p289 = scmp.lt.s32.totalorder %s20, 1
      %s290 = scalar_select %p289, %s20, 1
      %s291 = smul.addr %s290, 2
      %s292 = smul.addr %s291, 4
      %s293 = scalar_lea.vmem %s0, %s292
      %p294 = scmp.lt.s32.totalorder %s20, 1
      %s295 = scalar_select %p294, %s20, 1
      %s296 = smul.addr %s295, 16
      %s297 = smul.addr %s296, 4
      %s298 = scalar_lea.vmem %s1, %s297
      %p299 = scmp.lt.s32.totalorder %s20, 1
      %s300 = scalar_select %p299, %s20, 1
      %s301 = scalar_lea.vmem %s2, %s300
      %s302 = smul.u32 4, %s21
      %p303 = scmp.lt.s32.totalorder %s302, 3
      %s304 = scalar_select %p303, %s302, 3
      %s305 = smul.addr %s304, 4
      %s306 = scalar_lea.vmem %s3, %s305
      %s307 = smul.u32 4, %s21
      %s308 = smul.u32 4, %s21
      %p309 = scmp.lt.s32.totalorder %s308, 3
      %s310 = scalar_select %p309, %s308, 3
      %s311 = scalar_lea.vmem %s4, %s310
      %s312 = smul.u32 4, %s21
      %s313 = smul.u32 4, %s21
      %p314 = scmp.lt.s32.totalorder %s20, 1
      %s315 = scalar_select %p314, %s20, 1
      %p316 = scmp.lt.s32.totalorder %s313, 3
      %s317 = scalar_select %p316, %s313, 3
      %s318 = smul.addr %s315, 8
      %s319 = sadd.s32 %s317, %s318
      %s320 = smul.addr %s319, 8
      %s321 = scalar_lea.vmem %s5, %s320
      %s322 = smul.u32 4, %s21
      %p323 = scmp.eq.s32.totalorder %s21, 0
      // Predicated region
      $region41: #{s2s_gru_forward.5} parent=39 // pred_check
        %p324 = pneg %p323
      $region42: #{s2s_gru_forward.5} parent=39 // pred_check_branch
        %326 = sbr.rel (%p324) target = $region44
      $region43: #{s2s_gru_forward.5} parent=39 // pred_region
        %v327 = vld [vmem:[%s293] sm:$0xf]
        %v328 = vld [vmem:[%s293 + $0x4] sm:$0xf]
        %v329 = vld [vmem:[%s298] sm:$0xf]
        %v330 = vld [vmem:[%s298 + $0x4] sm:$0xf]
        %v331 = vld [vmem:[%s298 + $0x8] sm:$0xf]
        %v332 = vld [vmem:[%s298 + $0xc] sm:$0xf]
        %v333 = vld [vmem:[%s298 + $0x10] sm:$0xf]
        %v334 = vld [vmem:[%s298 + $0x14] sm:$0xf]
        %v335 = vld [vmem:[%s298 + $0x18] sm:$0xf]
        %v336 = vld [vmem:[%s298 + $0x1c] sm:$0xf]
        %v337 = vld [vmem:[%s298 + $0x20] sm:$0xf]
        %v338 = vld [vmem:[%s298 + $0x24] sm:$0xf]
        %v339 = vld [vmem:[%s298 + $0x28] sm:$0xf]
        %v340 = vld [vmem:[%s298 + $0x2c] sm:$0xf]
        %v341 = vld [vmem:[%s298 + $0x30] sm:$0xf]
        %v342 = vld [vmem:[%s298 + $0x34] sm:$0xf]
        %v343 = vld [vmem:[%s298 + $0x38] sm:$0xf]
        %v344 = vld [vmem:[%s298 + $0x3c] sm:$0xf]
        %v345 = vld [vmem:[%s301] sm:$0x1]
        %v347 = vperm.slane %v345, 0
        %v351 = vunpack.c.l.b16 %v327
        %v352 = vunpack.c.l.b16 %v328
        %v353 = vpack.c.b16 %v352, %v351
        %v371 = vunpack.c.l.b16 %v329
        %v372 = vunpack.c.l.b16 %v330
        %v373 = vunpack.c.l.b16 %v331
        %v374 = vunpack.c.l.b16 %v332
        %v375 = vunpack.c.l.b16 %v333
        %v376 = vunpack.c.l.b16 %v334
        %v377 = vunpack.c.l.b16 %v335
        %v378 = vunpack.c.l.b16 %v336
        %v379 = vunpack.c.l.b16 %v337
        %v380 = vunpack.c.l.b16 %v338
        %v381 = vunpack.c.l.b16 %v339
        %v382 = vunpack.c.l.b16 %v340
        %v383 = vunpack.c.l.b16 %v341
        %v384 = vunpack.c.l.b16 %v342
        %v385 = vunpack.c.l.b16 %v343
        %v386 = vunpack.c.l.b16 %v344
        %v387 = vpack.c.b16 %v372, %v371
        %v388 = vpack.c.b16 %v374, %v373
        %v389 = vpack.c.b16 %v376, %v375
        %v390 = vpack.c.b16 %v378, %v377
        %v391 = vpack.c.b16 %v380, %v379
        %v392 = vpack.c.b16 %v382, %v381
        %v393 = vpack.c.b16 %v384, %v383
        %v394 = vpack.c.b16 %v386, %v385
        %403 = vmatpush.bf16.msra.mxu0 %v394
        %404 = vmatpush.bf16.msra.mxu0 %v393
        %405 = vmatpush.bf16.msra.mxu0 %v392
        %406 = vmatpush.bf16.msra.mxu0 %v391
        %407 = vmatpush.bf16.msra.mxu0 %v390
        %408 = vmatpush.bf16.msra.mxu0 %v389
        %409 = vmatpush.bf16.msra.mxu0 %v388
        %410 = vmatpush.bf16.msra.mxu0 %v387
        %411 = vmatmul.bf16.gmra.mxu0 %v353
        %v412 = vpop.f32.mrf.mxu0
        %v413 = vadd.f32 %v347, %v412
        %v414 = vpop.f32.mrf.mxu0
        %v415 = vadd.f32 %v347, %v414
        %416 = vdwg.mxu0
        %v417 = vpack.c.bf16 %v413, %v413
        %v418 = vpack.c.bf16 %v415, %v415
        %419 = vst [vmem:[#allocation2] sm:$0xf] %v417
        %420 = vst [vmem:[#allocation2 + $0x4] sm:$0xf] %v418
      $region44: #{s2s_gru_forward.5} parent=39 // pred_fallthru
        _
      %v421 = vld [vmem:[#allocation2] sm:$0xf]
      %v422 = vld [vmem:[#allocation2 + $0x4] sm:$0xf]
      %v423 = vld [vmem:[%s306] sm:$0xff]
      %v424 = vld [vmem:[%s306 + $0x8] sm:$0xff]
      %v425 = vld [vmem:[%s306 + $0x10] sm:$0xff]
      %v426 = vld [vmem:[%s306 + $0x18] sm:$0xff]
      %v427 = vld [vmem:[%s306 + $0x20] sm:$0xff]
      %v428 = vld [vmem:[%s306 + $0x28] sm:$0xff]
      %v429 = vld [vmem:[%s306 + $0x30] sm:$0xff]
      %v430 = vld [vmem:[%s306 + $0x38] sm:$0xff]
      %v431 = vld [vmem:[%s306 + $0x40] sm:$0xff]
      %v432 = vld [vmem:[%s306 + $0x48] sm:$0xff]
      %v433 = vld [vmem:[%s306 + $0x50] sm:$0xff]
      %v434 = vld [vmem:[%s306 + $0x58] sm:$0xff]
      %v435 = vld [vmem:[%s306 + $0x60] sm:$0xff]
      %v436 = vld [vmem:[%s306 + $0x68] sm:$0xff]
      %v437 = vld [vmem:[%s306 + $0x70] sm:$0xff]
      %v438 = vld [vmem:[%s306 + $0x78] sm:$0xff]
      %v439 = vld [vmem:[%s306 + $0x80] sm:$0xff]
      %v440 = vld [vmem:[%s306 + $0x88] sm:$0xff]
      %v441 = vld [vmem:[%s306 + $0x90] sm:$0xff]
      %v442 = vld [vmem:[%s306 + $0x98] sm:$0xff]
      %v443 = vld [vmem:[%s306 + $0xa0] sm:$0xff]
      %v444 = vld [vmem:[%s306 + $0xa8] sm:$0xff]
      %v445 = vld [vmem:[%s306 + $0xb0] sm:$0xff]
      %v446 = vld [vmem:[%s306 + $0xb8] sm:$0xff]
      %v447 = vld [vmem:[%s306 + $0xc0] sm:$0xff]
      %v448 = vld [vmem:[%s306 + $0xc8] sm:$0xff]
      %v449 = vld [vmem:[%s306 + $0xd0] sm:$0xff]
      %v450 = vld [vmem:[%s306 + $0xd8] sm:$0xff]
      %v451 = vld [vmem:[%s306 + $0xe0] sm:$0xff]
      %v452 = vld [vmem:[%s306 + $0xe8] sm:$0xff]
      %v453 = vld [vmem:[%s306 + $0xf0] sm:$0xff]
      %v454 = vld [vmem:[%s306 + $0xf8] sm:$0xff]
      %v455 = vld [vmem:[%s311] sm:$0xf]
      %v457 = vperm.slane %v455, 0
      %v458 = vperm.slane %v455, 1
      %v459 = vperm.slane %v455, 2
      %v460 = vperm.slane %v455, 3
      %v467 = vunpack.c.l.b16 %v421
      %v468 = vunpack.c.l.b16 %v422
      %v469 = vpack.c.b16 %v468, %v467
      %v503 = vunpack.c.l.b16 %v423
      %v504 = vunpack.c.h.b16 %v423
      %v505 = vunpack.c.l.b16 %v424
      %v506 = vunpack.c.h.b16 %v424
      %v507 = vunpack.c.l.b16 %v425
      %v508 = vunpack.c.h.b16 %v425
      %v509 = vunpack.c.l.b16 %v426
      %v510 = vunpack.c.h.b16 %v426
      %v511 = vunpack.c.l.b16 %v427
      %v512 = vunpack.c.h.b16 %v427
      %v513 = vunpack.c.l.b16 %v428
      %v514 = vunpack.c.h.b16 %v428
      %v515 = vunpack.c.l.b16 %v429
      %v516 = vunpack.c.h.b16 %v429
      %v517 = vunpack.c.l.b16 %v430
      %v518 = vunpack.c.h.b16 %v430
      %v519 = vunpack.c.l.b16 %v431
      %v520 = vunpack.c.h.b16 %v431
      %v521 = vunpack.c.l.b16 %v432
      %v522 = vunpack.c.h.b16 %v432
      %v523 = vunpack.c.l.b16 %v433
      %v524 = vunpack.c.h.b16 %v433
      %v525 = vunpack.c.l.b16 %v434
      %v526 = vunpack.c.h.b16 %v434
      %v527 = vunpack.c.l.b16 %v435
      %v528 = vunpack.c.h.b16 %v435
      %v529 = vunpack.c.l.b16 %v436
      %v530 = vunpack.c.h.b16 %v436
      %v531 = vunpack.c.l.b16 %v437
      %v532 = vunpack.c.h.b16 %v437
      %v533 = vunpack.c.l.b16 %v438
      %v534 = vunpack.c.h.b16 %v438
      %v535 = vunpack.c.l.b16 %v439
      %v536 = vunpack.c.h.b16 %v439
      %v537 = vunpack.c.l.b16 %v440
      %v538 = vunpack.c.h.b16 %v440
      %v539 = vunpack.c.l.b16 %v441
      %v540 = vunpack.c.h.b16 %v441
      %v541 = vunpack.c.l.b16 %v442
      %v542 = vunpack.c.h.b16 %v442
      %v543 = vunpack.c.l.b16 %v443
      %v544 = vunpack.c.h.b16 %v443
      %v545 = vunpack.c.l.b16 %v444
      %v546 = vunpack.c.h.b16 %v444
      %v547 = vunpack.c.l.b16 %v445
      %v548 = vunpack.c.h.b16 %v445
      %v549 = vunpack.c.l.b16 %v446
      %v550 = vunpack.c.h.b16 %v446
      %v551 = vunpack.c.l.b16 %v447
      %v552 = vunpack.c.h.b16 %v447
      %v553 = vunpack.c.l.b16 %v448
      %v554 = vunpack.c.h.b16 %v448
      %v555 = vunpack.c.l.b16 %v449
      %v556 = vunpack.c.h.b16 %v449
      %v557 = vunpack.c.l.b16 %v450
      %v558 = vunpack.c.h.b16 %v450
      %v559 = vunpack.c.l.b16 %v451
      %v560 = vunpack.c.h.b16 %v451
      %v561 = vunpack.c.l.b16 %v452
      %v562 = vunpack.c.h.b16 %v452
      %v563 = vunpack.c.l.b16 %v453
      %v564 = vunpack.c.h.b16 %v453
      %v565 = vunpack.c.l.b16 %v454
      %v566 = vunpack.c.h.b16 %v454
      %v567 = vpack.c.b16 %v507, %v503
      %v568 = vpack.c.b16 %v508, %v504
      %v569 = vpack.c.b16 %v509, %v505
      %v570 = vpack.c.b16 %v510, %v506
      %v571 = vpack.c.b16 %v515, %v511
      %v572 = vpack.c.b16 %v516, %v512
      %v573 = vpack.c.b16 %v517, %v513
      %v574 = vpack.c.b16 %v518, %v514
      %v575 = vpack.c.b16 %v523, %v519
      %v576 = vpack.c.b16 %v524, %v520
      %v577 = vpack.c.b16 %v525, %v521
      %v578 = vpack.c.b16 %v526, %v522
      %v579 = vpack.c.b16 %v531, %v527
      %v580 = vpack.c.b16 %v532, %v528
      %v581 = vpack.c.b16 %v533, %v529
      %v582 = vpack.c.b16 %v534, %v530
      %v583 = vpack.c.b16 %v539, %v535
      %v584 = vpack.c.b16 %v540, %v536
      %v585 = vpack.c.b16 %v541, %v537
      %v586 = vpack.c.b16 %v542, %v538
      %v587 = vpack.c.b16 %v547, %v543
      %v588 = vpack.c.b16 %v548, %v544
      %v589 = vpack.c.b16 %v549, %v545
      %v590 = vpack.c.b16 %v550, %v546
      %v591 = vpack.c.b16 %v555, %v551
      %v592 = vpack.c.b16 %v556, %v552
      %v593 = vpack.c.b16 %v557, %v553
      %v594 = vpack.c.b16 %v558, %v554
      %v595 = vpack.c.b16 %v563, %v559
      %v596 = vpack.c.b16 %v564, %v560
      %v597 = vpack.c.b16 %v565, %v561
      %v598 = vpack.c.b16 %v566, %v562
      %631 = vmatpush.bf16.msra.mxu0 %v595
      %632 = vmatpush.bf16.msra.mxu0 %v591
      %633 = vmatpush.bf16.msra.mxu0 %v587
      %634 = vmatpush.bf16.msra.mxu0 %v583
      %635 = vmatpush.bf16.msra.mxu0 %v579
      %636 = vmatpush.bf16.msra.mxu0 %v575
      %637 = vmatpush.bf16.msra.mxu0 %v571
      %638 = vmatpush.bf16.msra.mxu0 %v567
      %639 = vmatmul.bf16.gmra.mxu0 %v469
      %v640 = vpop.f32.mrf.mxu0
      %v641 = vadd.f32 %v457, %v640
      %v642 = vpop.f32.mrf.mxu0
      %v643 = vadd.f32 %v457, %v642
      %644 = vdwg.mxu0
      %645 = vmatpush.bf16.msra.mxu0 %v596
      %646 = vmatpush.bf16.msra.mxu0 %v592
      %647 = vmatpush.bf16.msra.mxu0 %v588
      %648 = vmatpush.bf16.msra.mxu0 %v584
      %649 = vmatpush.bf16.msra.mxu0 %v580
      %650 = vmatpush.bf16.msra.mxu0 %v576
      %651 = vmatpush.bf16.msra.mxu0 %v572
      %652 = vmatpush.bf16.msra.mxu0 %v568
      %653 = vmatmul.bf16.gmra.mxu0 %v469
      %v654 = vpop.f32.mrf.mxu0
      %v655 = vadd.f32 %v458, %v654
      %v656 = vpop.f32.mrf.mxu0
      %v657 = vadd.f32 %v458, %v656
      %658 = vdwg.mxu0
      %659 = vmatpush.bf16.msra.mxu0 %v597
      %660 = vmatpush.bf16.msra.mxu0 %v593
      %661 = vmatpush.bf16.msra.mxu0 %v589
      %662 = vmatpush.bf16.msra.mxu0 %v585
      %663 = vmatpush.bf16.msra.mxu0 %v581
      %664 = vmatpush.bf16.msra.mxu0 %v577
      %665 = vmatpush.bf16.msra.mxu0 %v573
      %666 = vmatpush.bf16.msra.mxu0 %v569
      %667 = vmatmul.bf16.gmra.mxu0 %v469
      %v668 = vpop.f32.mrf.mxu0
      %v669 = vadd.f32 %v459, %v668
      %v670 = vpop.f32.mrf.mxu0
      %v671 = vadd.f32 %v459, %v670
      %672 = vdwg.mxu0
      %673 = vmatpush.bf16.msra.mxu0 %v598
      %674 = vmatpush.bf16.msra.mxu0 %v594
      %675 = vmatpush.bf16.msra.mxu0 %v590
      %676 = vmatpush.bf16.msra.mxu0 %v586
      %677 = vmatpush.bf16.msra.mxu0 %v582
      %678 = vmatpush.bf16.msra.mxu0 %v578
      %679 = vmatpush.bf16.msra.mxu0 %v574
      %680 = vmatpush.bf16.msra.mxu0 %v570
      %681 = vmatmul.bf16.gmra.mxu0 %v469
      %v682 = vpop.f32.mrf.mxu0
      %v683 = vadd.f32 %v460, %v682
      %v684 = vpop.f32.mrf.mxu0
      %v685 = vadd.f32 %v460, %v684
      %686 = vdwg.mxu0
      %687 = vst [vmem:[%s321] sm:$0xff] %v641
      %688 = vst [vmem:[%s321 + $0x8] sm:$0xff] %v655
      %689 = vst [vmem:[%s321 + $0x10] sm:$0xff] %v669
      %690 = vst [vmem:[%s321 + $0x18] sm:$0xff] %v683
      %691 = vst [vmem:[%s321 + $0x20] sm:$0xff] %v643
      %692 = vst [vmem:[%s321 + $0x28] sm:$0xff] %v657
      %693 = vst [vmem:[%s321 + $0x30] sm:$0xff] %v671
      %694 = vst [vmem:[%s321 + $0x38] sm:$0xff] %v685
      %s695 = smul.u32 4, %s21
      %p696 = scmp.lt.s32.totalorder %s20, 1
      %s697 = scalar_select %p696, %s20, 1
      %p698 = scmp.lt.s32.totalorder %s695, 3
      %s699 = scalar_select %p698, %s695, 3
      %s700 = smul.addr %s697, 8
      %s701 = sadd.s32 %s699, %s700
      %s702 = smul.addr %s701, 8
      %s703 = scalar_lea.vmem %s5, %s702
      // Predicated region
      $region45: #{s2s_gru_forward.5} parent=39 // pred_check
        %p704 = pneg %p178
      $region46: #{s2s_gru_forward.5} parent=39 // pred_check_branch
        %706 = sbr.rel (%p704) target = $region48
      $region47: #{s2s_gru_forward.5} parent=39 // pred_region
        %s707 = smul.u32 4, %s21
      $region48: #{s2s_gru_forward.5} parent=39 // pred_fallthru
        _
    $region40: #{s2s_gru_forward.5} parent=5 // pred_fallthru
      _
    %p708 = scmp.le.s32.totalorder 2, %s11
    // Predicated region
    $region49: #{s2s_gru_forward.5} parent=5 // pred_check
      %p709 = pneg %p708
    $region50: #{s2s_gru_forward.5} parent=5 // pred_check_branch
      %711 = sbr.rel (%p709) target = $region52
    $region51: #{s2s_gru_forward.5} parent=5 // pred_region
      %s712 = ssub.s32 %s11, 2
      // Predicated region
      $region53: #{s2s_gru_forward.5} parent=51 // pred_check
        %p713 = pneg %p184
      $region54: #{s2s_gru_forward.5} parent=51 // pred_check_branch
        %715 = sbr.rel (%p713) target = $region56
      $region55: #{s2s_gru_forward.5} parent=51 // pred_region
        %s716 = smul.u32 4, %s23
        %p717 = scmp.lt.s32.totalorder %s22, 1
        %s718 = scalar_select %p717, %s22, 1
        %p719 = scmp.lt.s32.totalorder %s716, 3
        %s720 = scalar_select %p719, %s716, 3
        %s721 = smul.addr %s718, 8
        %s722 = sadd.s32 %s720, %s721
        %s723 = smul.addr %s722, 8
        %s724 = scalar_lea.vmem %s5, %s723
      $region56: #{s2s_gru_forward.5} parent=51 // pred_fallthru
        _
    $region52: #{s2s_gru_forward.5} parent=5 // pred_fallthru
      _
  $region6: #{s2s_gru_forward.5} parent=0 // loop_footer
    %s15 = sadd.s32 1, %s11
  $region7: #{s2s_gru_forward.5} parent=0 // loop_footer_branch
    %10 = sbr.rel target = $region3
  $region8: #{s2s_gru_forward.5} parent=0 // loop_exit
    _

</llo_original>
